<compile_context>
chip_gen: v7x
topology: tpu7x:2x2x1
jax: 0.10.0
libtpu: 0.0.40
codegen_flags: <defaults>
</compile_context>

<pallas_src>
import math
import jax
import jax.numpy as jnp
from jax import lax
from jax.experimental import pallas as pl
from jax.experimental.pallas import tpu as pltpu

# ----------------------------- config ---------------------------------------
B = 2          # batch
S = 8          # sequence length
D_MODEL = 32
N_HEADS = 4
D_HEAD = D_MODEL // N_HEADS
D_FF = 64
EPS = 1e-6


# ------------------- fused kernel: MHA + LN1 + FFN + LN2 --------------------
def encoder_layer_kernel(x_ref, wqkv_ref, bqkv_ref, wo_ref, bo_ref,
                         g1_ref, be1_ref, w1_ref, b1_ref, w2_ref, b2_ref,
                         g2_ref, be2_ref, out_ref):
    x = x_ref[...].astype(jnp.float32)                    # (B*S, D)

    # ---- fused Q/K/V projection: one MXU pass with N = 3*D ----
    qkv = jnp.dot(x, wqkv_ref[...], preferred_element_type=jnp.float32) + bqkv_ref[...]
    q = qkv[:, 0:D_MODEL]
    k = qkv[:, D_MODEL:2 * D_MODEL]
    v = qkv[:, 2 * D_MODEL:3 * D_MODEL]

    scale = 1.0 / math.sqrt(D_HEAD)

    # ---- per-batch attention with W_O folded per head (no head concat) ----
    batch_outs = []
    for b in range(B):                                    # static loop, B=2
        r0 = b * S                                        # 8-row (sublane-aligned) slices
        qb = q[r0:r0 + S, :]
        kb = k[r0:r0 + S, :]
        vb = v[r0:r0 + S, :]
        o_b = jnp.zeros((S, D_MODEL), jnp.float32)
        for h in range(N_HEADS):                          # static loop over heads
            lo = h * D_HEAD
            qh = qb[:, lo:lo + D_HEAD]
            kh = kb[:, lo:lo + D_HEAD]
            vh = vb[:, lo:lo + D_HEAD]
            s = jnp.dot(qh, kh.T, preferred_element_type=jnp.float32) * scale   # (S, S)
            s = s - s.max(axis=-1, keepdims=True)         # stable softmax
            p = jnp.exp(s)
            p = p * pl.reciprocal(p.sum(axis=-1, keepdims=True), approx=True)   # EUP recip
            ah = jnp.dot(p, vh, preferred_element_type=jnp.float32)             # (S, D_HEAD)
            # fold output projection per head: rows lo:lo+D_HEAD of W_O
            o_b = o_b + jnp.dot(ah, wo_ref[lo:lo + D_HEAD, :],
                                preferred_element_type=jnp.float32)
        batch_outs.append(o_b)
    o = jnp.concatenate(batch_outs, axis=0) + bo_ref[...]  # (B*S, D), sublane-aligned concat

    # ---- residual + LayerNorm1 (rsqrt on EUP) ----
    y = o + x
    mean1 = y.mean(axis=-1, keepdims=True)
    var1 = jnp.mean((y - mean1) ** 2, axis=-1, keepdims=True)
    y = (y - mean1) * lax.rsqrt(var1 + EPS) * g1_ref[...] + be1_ref[...]

    # ---- feed-forward ----
    h1 = jnp.dot(y, w1_ref[...], preferred_element_type=jnp.float32) + b1_ref[...]
    h1 = jnp.maximum(h1, 0.0)                             # ReLU
    # TODO(synk): dropout is identity at inference (DROPOUT applied only in training)
    f = jnp.dot(h1, w2_ref[...], preferred_element_type=jnp.float32) + b2_ref[...]

    # ---- residual + LayerNorm2 ----
    z = f + y
    mean2 = z.mean(axis=-1, keepdims=True)
    var2 = jnp.mean((z - mean2) ** 2, axis=-1, keepdims=True)
    z = (z - mean2) * lax.rsqrt(var2 + EPS) * g2_ref[...] + be2_ref[...]

    out_ref[...] = z.astype(out_ref.dtype)


# ----------------------------- wrapper ---------------------------------------
def _full(shape):
    # whole-array block (block dims equal full array dims -> satisfies tiling rule)
    nd = len(shape)
    return pl.BlockSpec(shape, lambda i, _n=nd: (0,) * _n)


def encoder_layer(x, params):
    (wq, bq, wk, bk, wv, bv, wo, bo, g1, be1, w1, b1, w2, b2, g2, be2) = params

    # wrapper-side QKV weight fusion (done once, free relative to the kernel)
    wqkv = jnp.concatenate([wq, wk, wv], axis=1)          # (D, 3D)
    bqkv = jnp.concatenate([bq, bk, bv], axis=1)          # (1, 3D)

    # flatten batch into rows: all row-wise ops see a single lane-friendly slab
    x2d = x.reshape(B * S, D_MODEL)

    operands = (x2d, wqkv, bqkv, wo, bo, g1, be1, w1, b1, w2, b2, g2, be2)

    # advisory cost hint for XLA scheduling around the custom call
    flops = (
        2 * (B * S) * D_MODEL * (3 * D_MODEL)                       # fused QKV
        + B * N_HEADS * (2 * S * D_HEAD * S                         # scores
                         + 2 * S * S * D_HEAD                       # p @ v
                         + 2 * S * D_HEAD * D_MODEL)                # (p@v) @ W_O[h]
        + 2 * (B * S) * D_MODEL * D_FF                              # FFN up
        + 2 * (B * S) * D_FF * D_MODEL                              # FFN down
    )
    transcendentals = B * N_HEADS * S * S + B * N_HEADS * S + 2 * B * S  # exp + recip + rsqrt
    bytes_accessed = 4 * (sum(int(op.size) for op in operands) + B * S * D_MODEL)
    cost = pl.CostEstimate(flops=flops, transcendentals=transcendentals,
                           bytes_accessed=bytes_accessed)

    out2d = pl.pallas_call(
        encoder_layer_kernel,
        out_shape=jax.ShapeDtypeStruct((B * S, D_MODEL), jnp.float32),
        grid_spec=pltpu.PrefetchScalarGridSpec(
            num_scalar_prefetch=0,
            grid=(1,),                                    # single invocation, no serial loop
            in_specs=[_full(op.shape) for op in operands],
            out_specs=_full((B * S, D_MODEL))),
        compiler_params=pltpu.CompilerParams(dimension_semantics=("arbitrary",)),
        cost_estimate=cost,
    )(*operands)

    return out2d.reshape(B, S, D_MODEL)


# ----------------------------- reference (plain JAX) -------------------------
def encoder_layer_ref(x, params):
    (wq, bq, wk, bk, wv, bv, wo, bo, g1, be1, w1, b1, w2, b2, g2, be2) = params

    def ln(y, g, be):
        m = y.mean(-1, keepdims=True)
        v = ((y - m) ** 2).mean(-1, keepdims=True)
        return (y - m) / jnp.sqrt(v + EPS) * g + be

    q = x @ wq + bq
    k = x @ wk + bk
    v = x @ wv + bv
    qh = q.reshape(B, S, N_HEADS, D_HEAD).transpose(0, 2, 1, 3)
    kh = k.reshape(B, S, N_HEADS, D_HEAD).transpose(0, 2, 1, 3)
    vh = v.reshape(B, S, N_HEADS, D_HEAD).transpose(0, 2, 1, 3)
    s = jnp.einsum("bhqd,bhkd->bhqk", qh, kh) / math.sqrt(D_HEAD)
    p = jax.nn.softmax(s, axis=-1)
    a = jnp.einsum("bhqk,bhkd->bhqd", p, vh).transpose(0, 2, 1, 3).reshape(B, S, D_MODEL)
    o = a @ wo + bo
    y = ln(o + x, g1, be1)
    f = jnp.maximum(y @ w1 + b1, 0.0) @ w2 + b2
    return ln(f + y, g2, be2)


# ----------------------------- main ------------------------------------------
if __name__ == "__main__":
    key = jax.random.PRNGKey(0)
    keys = jax.random.split(key, 9)

    x = jax.random.normal(keys[0], (B, S, D_MODEL), jnp.float32)

    def winit(k, shape, scale=0.1):
        return (scale * jax.random.normal(k, shape)).astype(jnp.float32)

    # biases kept 2D (1, N) for TPU-friendly layout
    wq = winit(keys[1], (D_MODEL, D_MODEL)); bq = jnp.zeros((1, D_MODEL), jnp.float32)
    wk = winit(keys[2], (D_MODEL, D_MODEL)); bk = jnp.zeros((1, D_MODEL), jnp.float32)
    wv = winit(keys[3], (D_MODEL, D_MODEL)); bv = jnp.zeros((1, D_MODEL), jnp.float32)
    wo = winit(keys[4], (D_MODEL, D_MODEL)); bo = jnp.zeros((1, D_MODEL), jnp.float32)
    g1 = jnp.ones((1, D_MODEL), jnp.float32); be1 = jnp.zeros((1, D_MODEL), jnp.float32)
    w1 = winit(keys[5], (D_MODEL, D_FF));    b1 = winit(keys[6], (1, D_FF), 0.01)
    w2 = winit(keys[7], (D_FF, D_MODEL));    b2 = winit(keys[8], (1, D_MODEL), 0.01)
    g2 = jnp.ones((1, D_MODEL), jnp.float32); be2 = jnp.zeros((1, D_MODEL), jnp.float32)

    params = (wq, bq, wk, bk, wv, bv, wo, bo, g1, be1, w1, b1, w2, b2, g2, be2)

    out = encoder_layer(x, params)
    out = jax.block_until_ready(out)

    ref = encoder_layer_ref(x, params)
    assert out.shape == (B, S, D_MODEL)
    # tolerance slightly relaxed vs 1e-4 because the kernel routes the softmax
    # denominator through the EUP approx reciprocal and LN through rsqrt.
    assert jnp.allclose(out, ref, atol=2e-3, rtol=2e-3), "mismatch vs reference"

    print("KERNEL_OK")
</pallas_src>

<mosaic_0001>
module attributes {stable_mosaic.version = 11 : i64} {
  func.func @encoder_layer_kernel(%arg0: i32, %arg1: memref<16x32xf32, #tpu.memory_space<vmem>>, %arg2: memref<32x96xf32, #tpu.memory_space<vmem>>, %arg3: memref<1x96xf32, #tpu.memory_space<vmem>>, %arg4: memref<32x32xf32, #tpu.memory_space<vmem>>, %arg5: memref<1x32xf32, #tpu.memory_space<vmem>>, %arg6: memref<1x32xf32, #tpu.memory_space<vmem>>, %arg7: memref<1x32xf32, #tpu.memory_space<vmem>>, %arg8: memref<32x64xf32, #tpu.memory_space<vmem>>, %arg9: memref<1x64xf32, #tpu.memory_space<vmem>>, %arg10: memref<64x32xf32, #tpu.memory_space<vmem>>, %arg11: memref<1x32xf32, #tpu.memory_space<vmem>>, %arg12: memref<1x32xf32, #tpu.memory_space<vmem>>, %arg13: memref<1x32xf32, #tpu.memory_space<vmem>>, %arg14: memref<16x32xf32, #tpu.memory_space<vmem>>) attributes {dimension_semantics = [#tpu.dimension_semantics<arbitrary>], iteration_bounds = array<i64: 1>, scalar_prefetch = 0 : i64, scratch_operands = 0 : i64, tpu.core_type = #tpu.core_type<tc>, window_params = [{pipeline_mode = #tpu.pipeline_mode<synchronous>, transform_indices = @transform_0, window_bounds = array<i64: 16, 32>}, {pipeline_mode = #tpu.pipeline_mode<synchronous>, transform_indices = @transform_1, window_bounds = array<i64: 32, 96>}, {pipeline_mode = #tpu.pipeline_mode<synchronous>, transform_indices = @transform_2, window_bounds = array<i64: 1, 96>}, {pipeline_mode = #tpu.pipeline_mode<synchronous>, transform_indices = @transform_3, window_bounds = array<i64: 32, 32>}, {pipeline_mode = #tpu.pipeline_mode<synchronous>, transform_indices = @transform_4, window_bounds = array<i64: 1, 32>}, {pipeline_mode = #tpu.pipeline_mode<synchronous>, transform_indices = @transform_5, window_bounds = array<i64: 1, 32>}, {pipeline_mode = #tpu.pipeline_mode<synchronous>, transform_indices = @transform_6, window_bounds = array<i64: 1, 32>}, {pipeline_mode = #tpu.pipeline_mode<synchronous>, transform_indices = @transform_7, window_bounds = array<i64: 32, 64>}, {pipeline_mode = #tpu.pipeline_mode<synchronous>, transform_indices = @transform_8, window_bounds = array<i64: 1, 64>}, {pipeline_mode = #tpu.pipeline_mode<synchronous>, transform_indices = @transform_9, window_bounds = array<i64: 64, 32>}, {pipeline_mode = #tpu.pipeline_mode<synchronous>, transform_indices = @transform_10, window_bounds = array<i64: 1, 32>}, {pipeline_mode = #tpu.pipeline_mode<synchronous>, transform_indices = @transform_11, window_bounds = array<i64: 1, 32>}, {pipeline_mode = #tpu.pipeline_mode<synchronous>, transform_indices = @transform_12, window_bounds = array<i64: 1, 32>}, {pipeline_mode = #tpu.pipeline_mode<synchronous>, transform_indices = @transform_13, window_bounds = array<i64: 16, 32>}]} {
    %c0 = arith.constant 0 : index
    %c0_0 = arith.constant 0 : index
    %0 = vector.load %arg1[%c0, %c0_0] : memref<16x32xf32, #tpu.memory_space<vmem>>, vector<16x32xf32>
    %c0_1 = arith.constant 0 : index
    %c0_2 = arith.constant 0 : index
    %1 = vector.load %arg2[%c0_1, %c0_2] : memref<32x96xf32, #tpu.memory_space<vmem>>, vector<32x96xf32>
    %cst = arith.constant dense<0.000000e+00> : vector<16x96xf32>
    %2 = tpu.matmul %0, %1, %cst {dimension_numbers = #tpu.dot_dimension_numbers<[1], [0], [0], [1], [0, 0, 1, 1], [], []>} : vector<16x32xf32>, vector<32x96xf32>, vector<16x96xf32> -> vector<16x96xf32>
    %c0_3 = arith.constant 0 : index
    %c0_4 = arith.constant 0 : index
    %3 = vector.load %arg3[%c0_3, %c0_4] : memref<1x96xf32, #tpu.memory_space<vmem>>, vector<1x96xf32>
    %4 = vector.broadcast %3 : vector<1x96xf32> to vector<16x96xf32>
    %5 = arith.addf %2, %4 : vector<16x96xf32>
    %6 = vector.extract_strided_slice %5 {offsets = [0, 0], sizes = [16, 32], strides = [1, 1]} : vector<16x96xf32> to vector<16x32xf32>
    %7 = vector.extract_strided_slice %5 {offsets = [0, 32], sizes = [16, 32], strides = [1, 1]} : vector<16x96xf32> to vector<16x32xf32>
    %8 = vector.extract_strided_slice %5 {offsets = [0, 64], sizes = [16, 32], strides = [1, 1]} : vector<16x96xf32> to vector<16x32xf32>
    %9 = vector.extract_strided_slice %6 {offsets = [0, 0], sizes = [8, 32], strides = [1, 1]} : vector<16x32xf32> to vector<8x32xf32>
    %10 = vector.extract_strided_slice %7 {offsets = [0, 0], sizes = [8, 32], strides = [1, 1]} : vector<16x32xf32> to vector<8x32xf32>
    %11 = vector.extract_strided_slice %8 {offsets = [0, 0], sizes = [8, 32], strides = [1, 1]} : vector<16x32xf32> to vector<8x32xf32>
    %cst_5 = arith.constant 0.000000e+00 : f32
    %12 = vector.broadcast %cst_5 : f32 to vector<8x32xf32>
    %13 = vector.extract_strided_slice %9 {offsets = [0, 0], sizes = [8, 8], strides = [1, 1]} : vector<8x32xf32> to vector<8x8xf32>
    %14 = vector.extract_strided_slice %10 {offsets = [0, 0], sizes = [8, 8], strides = [1, 1]} : vector<8x32xf32> to vector<8x8xf32>
    %15 = vector.extract_strided_slice %11 {offsets = [0, 0], sizes = [8, 8], strides = [1, 1]} : vector<8x32xf32> to vector<8x8xf32>
    %16 = tpu.transpose %14, [1, 0] : vector<8x8xf32> -> vector<8x8xf32>
    %cst_6 = arith.constant dense<0.000000e+00> : vector<8x8xf32>
    %17 = tpu.matmul %13, %16, %cst_6 {dimension_numbers = #tpu.dot_dimension_numbers<[1], [0], [0], [1], [0, 0, 1, 1], [], []>} : vector<8x8xf32>, vector<8x8xf32>, vector<8x8xf32> -> vector<8x8xf32>
    %cst_7 = arith.constant 0.353553385 : f32
    %18 = vector.broadcast %cst_7 : f32 to vector<8x8xf32>
    %19 = arith.mulf %17, %18 : vector<8x8xf32>
    %cst_8 = arith.constant dense<0xFF800000> : vector<8xf32>
    %20 = vector.multi_reduction <maximumf>, %19, %cst_8 [1] : vector<8x8xf32> to vector<8xf32>
    %21 = vector.shape_cast %20 : vector<8xf32> to vector<8x1xf32>
    %22 = vector.broadcast %21 : vector<8x1xf32> to vector<8x8xf32>
    %23 = arith.subf %19, %22 : vector<8x8xf32>
    %24 = math.exp %23 : vector<8x8xf32>
    %cst_9 = arith.constant dense<0.000000e+00> : vector<8xf32>
    %25 = vector.multi_reduction <add>, %24, %cst_9 [1] : vector<8x8xf32> to vector<8xf32>
    %26 = vector.shape_cast %25 : vector<8xf32> to vector<8x1xf32>
    %27 = tpu.reciprocal %26 {approx = true} : vector<8x1xf32> -> vector<8x1xf32>
    %28 = vector.broadcast %27 : vector<8x1xf32> to vector<8x8xf32>
    %29 = arith.mulf %24, %28 : vector<8x8xf32>
    %cst_10 = arith.constant dense<0.000000e+00> : vector<8x8xf32>
    %30 = tpu.matmul %29, %15, %cst_10 {dimension_numbers = #tpu.dot_dimension_numbers<[1], [0], [0], [1], [0, 0, 1, 1], [], []>} : vector<8x8xf32>, vector<8x8xf32>, vector<8x8xf32> -> vector<8x8xf32>
    %c0_11 = arith.constant 0 : index
    %c0_12 = arith.constant 0 : index
    %31 = vector.load %arg4[%c0_11, %c0_12] : memref<32x32xf32, #tpu.memory_space<vmem>>, vector<8x32xf32>
    %cst_13 = arith.constant dense<0.000000e+00> : vector<8x32xf32>
    %32 = tpu.matmul %30, %31, %cst_13 {dimension_numbers = #tpu.dot_dimension_numbers<[1], [0], [0], [1], [0, 0, 1, 1], [], []>} : vector<8x8xf32>, vector<8x32xf32>, vector<8x32xf32> -> vector<8x32xf32>
    %33 = arith.addf %12, %32 : vector<8x32xf32>
    %34 = vector.extract_strided_slice %9 {offsets = [0, 8], sizes = [8, 8], strides = [1, 1]} : vector<8x32xf32> to vector<8x8xf32>
    %35 = vector.extract_strided_slice %10 {offsets = [0, 8], sizes = [8, 8], strides = [1, 1]} : vector<8x32xf32> to vector<8x8xf32>
    %36 = vector.extract_strided_slice %11 {offsets = [0, 8], sizes = [8, 8], strides = [1, 1]} : vector<8x32xf32> to vector<8x8xf32>
    %37 = tpu.transpose %35, [1, 0] : vector<8x8xf32> -> vector<8x8xf32>
    %cst_14 = arith.constant dense<0.000000e+00> : vector<8x8xf32>
    %38 = tpu.matmul %34, %37, %cst_14 {dimension_numbers = #tpu.dot_dimension_numbers<[1], [0], [0], [1], [0, 0, 1, 1], [], []>} : vector<8x8xf32>, vector<8x8xf32>, vector<8x8xf32> -> vector<8x8xf32>
    %cst_15 = arith.constant 0.353553385 : f32
    %39 = vector.broadcast %cst_15 : f32 to vector<8x8xf32>
    %40 = arith.mulf %38, %39 : vector<8x8xf32>
    %cst_16 = arith.constant dense<0xFF800000> : vector<8xf32>
    %41 = vector.multi_reduction <maximumf>, %40, %cst_16 [1] : vector<8x8xf32> to vector<8xf32>
    %42 = vector.shape_cast %41 : vector<8xf32> to vector<8x1xf32>
    %43 = vector.broadcast %42 : vector<8x1xf32> to vector<8x8xf32>
    %44 = arith.subf %40, %43 : vector<8x8xf32>
    %45 = math.exp %44 : vector<8x8xf32>
    %cst_17 = arith.constant dense<0.000000e+00> : vector<8xf32>
    %46 = vector.multi_reduction <add>, %45, %cst_17 [1] : vector<8x8xf32> to vector<8xf32>
    %47 = vector.shape_cast %46 : vector<8xf32> to vector<8x1xf32>
    %48 = tpu.reciprocal %47 {approx = true} : vector<8x1xf32> -> vector<8x1xf32>
    %49 = vector.broadcast %48 : vector<8x1xf32> to vector<8x8xf32>
    %50 = arith.mulf %45, %49 : vector<8x8xf32>
    %cst_18 = arith.constant dense<0.000000e+00> : vector<8x8xf32>
    %51 = tpu.matmul %50, %36, %cst_18 {dimension_numbers = #tpu.dot_dimension_numbers<[1], [0], [0], [1], [0, 0, 1, 1], [], []>} : vector<8x8xf32>, vector<8x8xf32>, vector<8x8xf32> -> vector<8x8xf32>
    %c8 = arith.constant 8 : index
    %c0_19 = arith.constant 0 : index
    %52 = vector.load %arg4[%c8, %c0_19] : memref<32x32xf32, #tpu.memory_space<vmem>>, vector<8x32xf32>
    %cst_20 = arith.constant dense<0.000000e+00> : vector<8x32xf32>
    %53 = tpu.matmul %51, %52, %cst_20 {dimension_numbers = #tpu.dot_dimension_numbers<[1], [0], [0], [1], [0, 0, 1, 1], [], []>} : vector<8x8xf32>, vector<8x32xf32>, vector<8x32xf32> -> vector<8x32xf32>
    %54 = arith.addf %33, %53 : vector<8x32xf32>
    %55 = vector.extract_strided_slice %9 {offsets = [0, 16], sizes = [8, 8], strides = [1, 1]} : vector<8x32xf32> to vector<8x8xf32>
    %56 = vector.extract_strided_slice %10 {offsets = [0, 16], sizes = [8, 8], strides = [1, 1]} : vector<8x32xf32> to vector<8x8xf32>
    %57 = vector.extract_strided_slice %11 {offsets = [0, 16], sizes = [8, 8], strides = [1, 1]} : vector<8x32xf32> to vector<8x8xf32>
    %58 = tpu.transpose %56, [1, 0] : vector<8x8xf32> -> vector<8x8xf32>
    %cst_21 = arith.constant dense<0.000000e+00> : vector<8x8xf32>
    %59 = tpu.matmul %55, %58, %cst_21 {dimension_numbers = #tpu.dot_dimension_numbers<[1], [0], [0], [1], [0, 0, 1, 1], [], []>} : vector<8x8xf32>, vector<8x8xf32>, vector<8x8xf32> -> vector<8x8xf32>
    %cst_22 = arith.constant 0.353553385 : f32
    %60 = vector.broadcast %cst_22 : f32 to vector<8x8xf32>
    %61 = arith.mulf %59, %60 : vector<8x8xf32>
    %cst_23 = arith.constant dense<0xFF800000> : vector<8xf32>
    %62 = vector.multi_reduction <maximumf>, %61, %cst_23 [1] : vector<8x8xf32> to vector<8xf32>
    %63 = vector.shape_cast %62 : vector<8xf32> to vector<8x1xf32>
    %64 = vector.broadcast %63 : vector<8x1xf32> to vector<8x8xf32>
    %65 = arith.subf %61, %64 : vector<8x8xf32>
    %66 = math.exp %65 : vector<8x8xf32>
    %cst_24 = arith.constant dense<0.000000e+00> : vector<8xf32>
    %67 = vector.multi_reduction <add>, %66, %cst_24 [1] : vector<8x8xf32> to vector<8xf32>
    %68 = vector.shape_cast %67 : vector<8xf32> to vector<8x1xf32>
    %69 = tpu.reciprocal %68 {approx = true} : vector<8x1xf32> -> vector<8x1xf32>
    %70 = vector.broadcast %69 : vector<8x1xf32> to vector<8x8xf32>
    %71 = arith.mulf %66, %70 : vector<8x8xf32>
    %cst_25 = arith.constant dense<0.000000e+00> : vector<8x8xf32>
    %72 = tpu.matmul %71, %57, %cst_25 {dimension_numbers = #tpu.dot_dimension_numbers<[1], [0], [0], [1], [0, 0, 1, 1], [], []>} : vector<8x8xf32>, vector<8x8xf32>, vector<8x8xf32> -> vector<8x8xf32>
    %c16 = arith.constant 16 : index
    %c0_26 = arith.constant 0 : index
    %73 = vector.load %arg4[%c16, %c0_26] : memref<32x32xf32, #tpu.memory_space<vmem>>, vector<8x32xf32>
    %cst_27 = arith.constant dense<0.000000e+00> : vector<8x32xf32>
    %74 = tpu.matmul %72, %73, %cst_27 {dimension_numbers = #tpu.dot_dimension_numbers<[1], [0], [0], [1], [0, 0, 1, 1], [], []>} : vector<8x8xf32>, vector<8x32xf32>, vector<8x32xf32> -> vector<8x32xf32>
    %75 = arith.addf %54, %74 : vector<8x32xf32>
    %76 = vector.extract_strided_slice %9 {offsets = [0, 24], sizes = [8, 8], strides = [1, 1]} : vector<8x32xf32> to vector<8x8xf32>
    %77 = vector.extract_strided_slice %10 {offsets = [0, 24], sizes = [8, 8], strides = [1, 1]} : vector<8x32xf32> to vector<8x8xf32>
    %78 = vector.extract_strided_slice %11 {offsets = [0, 24], sizes = [8, 8], strides = [1, 1]} : vector<8x32xf32> to vector<8x8xf32>
    %79 = tpu.transpose %77, [1, 0] : vector<8x8xf32> -> vector<8x8xf32>
    %cst_28 = arith.constant dense<0.000000e+00> : vector<8x8xf32>
    %80 = tpu.matmul %76, %79, %cst_28 {dimension_numbers = #tpu.dot_dimension_numbers<[1], [0], [0], [1], [0, 0, 1, 1], [], []>} : vector<8x8xf32>, vector<8x8xf32>, vector<8x8xf32> -> vector<8x8xf32>
    %cst_29 = arith.constant 0.353553385 : f32
    %81 = vector.broadcast %cst_29 : f32 to vector<8x8xf32>
    %82 = arith.mulf %80, %81 : vector<8x8xf32>
    %cst_30 = arith.constant dense<0xFF800000> : vector<8xf32>
    %83 = vector.multi_reduction <maximumf>, %82, %cst_30 [1] : vector<8x8xf32> to vector<8xf32>
    %84 = vector.shape_cast %83 : vector<8xf32> to vector<8x1xf32>
    %85 = vector.broadcast %84 : vector<8x1xf32> to vector<8x8xf32>
    %86 = arith.subf %82, %85 : vector<8x8xf32>
    %87 = math.exp %86 : vector<8x8xf32>
    %cst_31 = arith.constant dense<0.000000e+00> : vector<8xf32>
    %88 = vector.multi_reduction <add>, %87, %cst_31 [1] : vector<8x8xf32> to vector<8xf32>
    %89 = vector.shape_cast %88 : vector<8xf32> to vector<8x1xf32>
    %90 = tpu.reciprocal %89 {approx = true} : vector<8x1xf32> -> vector<8x1xf32>
    %91 = vector.broadcast %90 : vector<8x1xf32> to vector<8x8xf32>
    %92 = arith.mulf %87, %91 : vector<8x8xf32>
    %cst_32 = arith.constant dense<0.000000e+00> : vector<8x8xf32>
    %93 = tpu.matmul %92, %78, %cst_32 {dimension_numbers = #tpu.dot_dimension_numbers<[1], [0], [0], [1], [0, 0, 1, 1], [], []>} : vector<8x8xf32>, vector<8x8xf32>, vector<8x8xf32> -> vector<8x8xf32>
    %c24 = arith.constant 24 : index
    %c0_33 = arith.constant 0 : index
    %94 = vector.load %arg4[%c24, %c0_33] : memref<32x32xf32, #tpu.memory_space<vmem>>, vector<8x32xf32>
    %cst_34 = arith.constant dense<0.000000e+00> : vector<8x32xf32>
    %95 = tpu.matmul %93, %94, %cst_34 {dimension_numbers = #tpu.dot_dimension_numbers<[1], [0], [0], [1], [0, 0, 1, 1], [], []>} : vector<8x8xf32>, vector<8x32xf32>, vector<8x32xf32> -> vector<8x32xf32>
    %96 = arith.addf %75, %95 : vector<8x32xf32>
    %97 = vector.extract_strided_slice %6 {offsets = [8, 0], sizes = [8, 32], strides = [1, 1]} : vector<16x32xf32> to vector<8x32xf32>
    %98 = vector.extract_strided_slice %7 {offsets = [8, 0], sizes = [8, 32], strides = [1, 1]} : vector<16x32xf32> to vector<8x32xf32>
    %99 = vector.extract_strided_slice %8 {offsets = [8, 0], sizes = [8, 32], strides = [1, 1]} : vector<16x32xf32> to vector<8x32xf32>
    %cst_35 = arith.constant 0.000000e+00 : f32
    %100 = vector.broadcast %cst_35 : f32 to vector<8x32xf32>
    %101 = vector.extract_strided_slice %97 {offsets = [0, 0], sizes = [8, 8], strides = [1, 1]} : vector<8x32xf32> to vector<8x8xf32>
    %102 = vector.extract_strided_slice %98 {offsets = [0, 0], sizes = [8, 8], strides = [1, 1]} : vector<8x32xf32> to vector<8x8xf32>
    %103 = vector.extract_strided_slice %99 {offsets = [0, 0], sizes = [8, 8], strides = [1, 1]} : vector<8x32xf32> to vector<8x8xf32>
    %104 = tpu.transpose %102, [1, 0] : vector<8x8xf32> -> vector<8x8xf32>
    %cst_36 = arith.constant dense<0.000000e+00> : vector<8x8xf32>
    %105 = tpu.matmul %101, %104, %cst_36 {dimension_numbers = #tpu.dot_dimension_numbers<[1], [0], [0], [1], [0, 0, 1, 1], [], []>} : vector<8x8xf32>, vector<8x8xf32>, vector<8x8xf32> -> vector<8x8xf32>
    %cst_37 = arith.constant 0.353553385 : f32
    %106 = vector.broadcast %cst_37 : f32 to vector<8x8xf32>
    %107 = arith.mulf %105, %106 : vector<8x8xf32>
    %cst_38 = arith.constant dense<0xFF800000> : vector<8xf32>
    %108 = vector.multi_reduction <maximumf>, %107, %cst_38 [1] : vector<8x8xf32> to vector<8xf32>
    %109 = vector.shape_cast %108 : vector<8xf32> to vector<8x1xf32>
    %110 = vector.broadcast %109 : vector<8x1xf32> to vector<8x8xf32>
    %111 = arith.subf %107, %110 : vector<8x8xf32>
    %112 = math.exp %111 : vector<8x8xf32>
    %cst_39 = arith.constant dense<0.000000e+00> : vector<8xf32>
    %113 = vector.multi_reduction <add>, %112, %cst_39 [1] : vector<8x8xf32> to vector<8xf32>
    %114 = vector.shape_cast %113 : vector<8xf32> to vector<8x1xf32>
    %115 = tpu.reciprocal %114 {approx = true} : vector<8x1xf32> -> vector<8x1xf32>
    %116 = vector.broadcast %115 : vector<8x1xf32> to vector<8x8xf32>
    %117 = arith.mulf %112, %116 : vector<8x8xf32>
    %cst_40 = arith.constant dense<0.000000e+00> : vector<8x8xf32>
    %118 = tpu.matmul %117, %103, %cst_40 {dimension_numbers = #tpu.dot_dimension_numbers<[1], [0], [0], [1], [0, 0, 1, 1], [], []>} : vector<8x8xf32>, vector<8x8xf32>, vector<8x8xf32> -> vector<8x8xf32>
    %c0_41 = arith.constant 0 : index
    %c0_42 = arith.constant 0 : index
    %119 = vector.load %arg4[%c0_41, %c0_42] : memref<32x32xf32, #tpu.memory_space<vmem>>, vector<8x32xf32>
    %cst_43 = arith.constant dense<0.000000e+00> : vector<8x32xf32>
    %120 = tpu.matmul %118, %119, %cst_43 {dimension_numbers = #tpu.dot_dimension_numbers<[1], [0], [0], [1], [0, 0, 1, 1], [], []>} : vector<8x8xf32>, vector<8x32xf32>, vector<8x32xf32> -> vector<8x32xf32>
    %121 = arith.addf %100, %120 : vector<8x32xf32>
    %122 = vector.extract_strided_slice %97 {offsets = [0, 8], sizes = [8, 8], strides = [1, 1]} : vector<8x32xf32> to vector<8x8xf32>
    %123 = vector.extract_strided_slice %98 {offsets = [0, 8], sizes = [8, 8], strides = [1, 1]} : vector<8x32xf32> to vector<8x8xf32>
    %124 = vector.extract_strided_slice %99 {offsets = [0, 8], sizes = [8, 8], strides = [1, 1]} : vector<8x32xf32> to vector<8x8xf32>
    %125 = tpu.transpose %123, [1, 0] : vector<8x8xf32> -> vector<8x8xf32>
    %cst_44 = arith.constant dense<0.000000e+00> : vector<8x8xf32>
    %126 = tpu.matmul %122, %125, %cst_44 {dimension_numbers = #tpu.dot_dimension_numbers<[1], [0], [0], [1], [0, 0, 1, 1], [], []>} : vector<8x8xf32>, vector<8x8xf32>, vector<8x8xf32> -> vector<8x8xf32>
    %cst_45 = arith.constant 0.353553385 : f32
    %127 = vector.broadcast %cst_45 : f32 to vector<8x8xf32>
    %128 = arith.mulf %126, %127 : vector<8x8xf32>
    %cst_46 = arith.constant dense<0xFF800000> : vector<8xf32>
    %129 = vector.multi_reduction <maximumf>, %128, %cst_46 [1] : vector<8x8xf32> to vector<8xf32>
    %130 = vector.shape_cast %129 : vector<8xf32> to vector<8x1xf32>
    %131 = vector.broadcast %130 : vector<8x1xf32> to vector<8x8xf32>
    %132 = arith.subf %128, %131 : vector<8x8xf32>
    %133 = math.exp %132 : vector<8x8xf32>
    %cst_47 = arith.constant dense<0.000000e+00> : vector<8xf32>
    %134 = vector.multi_reduction <add>, %133, %cst_47 [1] : vector<8x8xf32> to vector<8xf32>
    %135 = vector.shape_cast %134 : vector<8xf32> to vector<8x1xf32>
    %136 = tpu.reciprocal %135 {approx = true} : vector<8x1xf32> -> vector<8x1xf32>
    %137 = vector.broadcast %136 : vector<8x1xf32> to vector<8x8xf32>
    %138 = arith.mulf %133, %137 : vector<8x8xf32>
    %cst_48 = arith.constant dense<0.000000e+00> : vector<8x8xf32>
    %139 = tpu.matmul %138, %124, %cst_48 {dimension_numbers = #tpu.dot_dimension_numbers<[1], [0], [0], [1], [0, 0, 1, 1], [], []>} : vector<8x8xf32>, vector<8x8xf32>, vector<8x8xf32> -> vector<8x8xf32>
    %c8_49 = arith.constant 8 : index
    %c0_50 = arith.constant 0 : index
    %140 = vector.load %arg4[%c8_49, %c0_50] : memref<32x32xf32, #tpu.memory_space<vmem>>, vector<8x32xf32>
    %cst_51 = arith.constant dense<0.000000e+00> : vector<8x32xf32>
    %141 = tpu.matmul %139, %140, %cst_51 {dimension_numbers = #tpu.dot_dimension_numbers<[1], [0], [0], [1], [0, 0, 1, 1], [], []>} : vector<8x8xf32>, vector<8x32xf32>, vector<8x32xf32> -> vector<8x32xf32>
    %142 = arith.addf %121, %141 : vector<8x32xf32>
    %143 = vector.extract_strided_slice %97 {offsets = [0, 16], sizes = [8, 8], strides = [1, 1]} : vector<8x32xf32> to vector<8x8xf32>
    %144 = vector.extract_strided_slice %98 {offsets = [0, 16], sizes = [8, 8], strides = [1, 1]} : vector<8x32xf32> to vector<8x8xf32>
    %145 = vector.extract_strided_slice %99 {offsets = [0, 16], sizes = [8, 8], strides = [1, 1]} : vector<8x32xf32> to vector<8x8xf32>
    %146 = tpu.transpose %144, [1, 0] : vector<8x8xf32> -> vector<8x8xf32>
    %cst_52 = arith.constant dense<0.000000e+00> : vector<8x8xf32>
    %147 = tpu.matmul %143, %146, %cst_52 {dimension_numbers = #tpu.dot_dimension_numbers<[1], [0], [0], [1], [0, 0, 1, 1], [], []>} : vector<8x8xf32>, vector<8x8xf32>, vector<8x8xf32> -> vector<8x8xf32>
    %cst_53 = arith.constant 0.353553385 : f32
    %148 = vector.broadcast %cst_53 : f32 to vector<8x8xf32>
    %149 = arith.mulf %147, %148 : vector<8x8xf32>
    %cst_54 = arith.constant dense<0xFF800000> : vector<8xf32>
    %150 = vector.multi_reduction <maximumf>, %149, %cst_54 [1] : vector<8x8xf32> to vector<8xf32>
    %151 = vector.shape_cast %150 : vector<8xf32> to vector<8x1xf32>
    %152 = vector.broadcast %151 : vector<8x1xf32> to vector<8x8xf32>
    %153 = arith.subf %149, %152 : vector<8x8xf32>
    %154 = math.exp %153 : vector<8x8xf32>
    %cst_55 = arith.constant dense<0.000000e+00> : vector<8xf32>
    %155 = vector.multi_reduction <add>, %154, %cst_55 [1] : vector<8x8xf32> to vector<8xf32>
    %156 = vector.shape_cast %155 : vector<8xf32> to vector<8x1xf32>
    %157 = tpu.reciprocal %156 {approx = true} : vector<8x1xf32> -> vector<8x1xf32>
    %158 = vector.broadcast %157 : vector<8x1xf32> to vector<8x8xf32>
    %159 = arith.mulf %154, %158 : vector<8x8xf32>
    %cst_56 = arith.constant dense<0.000000e+00> : vector<8x8xf32>
    %160 = tpu.matmul %159, %145, %cst_56 {dimension_numbers = #tpu.dot_dimension_numbers<[1], [0], [0], [1], [0, 0, 1, 1], [], []>} : vector<8x8xf32>, vector<8x8xf32>, vector<8x8xf32> -> vector<8x8xf32>
    %c16_57 = arith.constant 16 : index
    %c0_58 = arith.constant 0 : index
    %161 = vector.load %arg4[%c16_57, %c0_58] : memref<32x32xf32, #tpu.memory_space<vmem>>, vector<8x32xf32>
    %cst_59 = arith.constant dense<0.000000e+00> : vector<8x32xf32>
    %162 = tpu.matmul %160, %161, %cst_59 {dimension_numbers = #tpu.dot_dimension_numbers<[1], [0], [0], [1], [0, 0, 1, 1], [], []>} : vector<8x8xf32>, vector<8x32xf32>, vector<8x32xf32> -> vector<8x32xf32>
    %163 = arith.addf %142, %162 : vector<8x32xf32>
    %164 = vector.extract_strided_slice %97 {offsets = [0, 24], sizes = [8, 8], strides = [1, 1]} : vector<8x32xf32> to vector<8x8xf32>
    %165 = vector.extract_strided_slice %98 {offsets = [0, 24], sizes = [8, 8], strides = [1, 1]} : vector<8x32xf32> to vector<8x8xf32>
    %166 = vector.extract_strided_slice %99 {offsets = [0, 24], sizes = [8, 8], strides = [1, 1]} : vector<8x32xf32> to vector<8x8xf32>
    %167 = tpu.transpose %165, [1, 0] : vector<8x8xf32> -> vector<8x8xf32>
    %cst_60 = arith.constant dense<0.000000e+00> : vector<8x8xf32>
    %168 = tpu.matmul %164, %167, %cst_60 {dimension_numbers = #tpu.dot_dimension_numbers<[1], [0], [0], [1], [0, 0, 1, 1], [], []>} : vector<8x8xf32>, vector<8x8xf32>, vector<8x8xf32> -> vector<8x8xf32>
    %cst_61 = arith.constant 0.353553385 : f32
    %169 = vector.broadcast %cst_61 : f32 to vector<8x8xf32>
    %170 = arith.mulf %168, %169 : vector<8x8xf32>
    %cst_62 = arith.constant dense<0xFF800000> : vector<8xf32>
    %171 = vector.multi_reduction <maximumf>, %170, %cst_62 [1] : vector<8x8xf32> to vector<8xf32>
    %172 = vector.shape_cast %171 : vector<8xf32> to vector<8x1xf32>
    %173 = vector.broadcast %172 : vector<8x1xf32> to vector<8x8xf32>
    %174 = arith.subf %170, %173 : vector<8x8xf32>
    %175 = math.exp %174 : vector<8x8xf32>
    %cst_63 = arith.constant dense<0.000000e+00> : vector<8xf32>
    %176 = vector.multi_reduction <add>, %175, %cst_63 [1] : vector<8x8xf32> to vector<8xf32>
    %177 = vector.shape_cast %176 : vector<8xf32> to vector<8x1xf32>
    %178 = tpu.reciprocal %177 {approx = true} : vector<8x1xf32> -> vector<8x1xf32>
    %179 = vector.broadcast %178 : vector<8x1xf32> to vector<8x8xf32>
    %180 = arith.mulf %175, %179 : vector<8x8xf32>
    %cst_64 = arith.constant dense<0.000000e+00> : vector<8x8xf32>
    %181 = tpu.matmul %180, %166, %cst_64 {dimension_numbers = #tpu.dot_dimension_numbers<[1], [0], [0], [1], [0, 0, 1, 1], [], []>} : vector<8x8xf32>, vector<8x8xf32>, vector<8x8xf32> -> vector<8x8xf32>
    %c24_65 = arith.constant 24 : index
    %c0_66 = arith.constant 0 : index
    %182 = vector.load %arg4[%c24_65, %c0_66] : memref<32x32xf32, #tpu.memory_space<vmem>>, vector<8x32xf32>
    %cst_67 = arith.constant dense<0.000000e+00> : vector<8x32xf32>
    %183 = tpu.matmul %181, %182, %cst_67 {dimension_numbers = #tpu.dot_dimension_numbers<[1], [0], [0], [1], [0, 0, 1, 1], [], []>} : vector<8x8xf32>, vector<8x32xf32>, vector<8x32xf32> -> vector<8x32xf32>
    %184 = arith.addf %163, %183 : vector<8x32xf32>
    %185 = tpu.concatenate %96, %184 in 0 : vector<8x32xf32>, vector<8x32xf32> -> vector<16x32xf32>
    %c0_68 = arith.constant 0 : index
    %c0_69 = arith.constant 0 : index
    %186 = vector.load %arg5[%c0_68, %c0_69] : memref<1x32xf32, #tpu.memory_space<vmem>>, vector<1x32xf32>
    %187 = vector.broadcast %186 : vector<1x32xf32> to vector<16x32xf32>
    %188 = arith.addf %185, %187 : vector<16x32xf32>
    %189 = arith.addf %188, %0 : vector<16x32xf32>
    %cst_70 = arith.constant dense<0.000000e+00> : vector<16xf32>
    %190 = vector.multi_reduction <add>, %189, %cst_70 [1] : vector<16x32xf32> to vector<16xf32>
    %191 = vector.shape_cast %190 : vector<16xf32> to vector<16x1xf32>
    %cst_71 = arith.constant 3.200000e+01 : f32
    %192 = vector.broadcast %cst_71 : f32 to vector<16x1xf32>
    %193 = arith.divf %191, %192 : vector<16x1xf32>
    %194 = vector.broadcast %193 : vector<16x1xf32> to vector<16x32xf32>
    %195 = arith.subf %189, %194 : vector<16x32xf32>
    %196 = arith.mulf %195, %195 : vector<16x32xf32>
    %cst_72 = arith.constant dense<0.000000e+00> : vector<16xf32>
    %197 = vector.multi_reduction <add>, %196, %cst_72 [1] : vector<16x32xf32> to vector<16xf32>
    %198 = vector.shape_cast %197 : vector<16xf32> to vector<16x1xf32>
    %cst_73 = arith.constant 3.200000e+01 : f32
    %199 = vector.broadcast %cst_73 : f32 to vector<16x1xf32>
    %200 = arith.divf %198, %199 : vector<16x1xf32>
    %201 = vector.broadcast %193 : vector<16x1xf32> to vector<16x32xf32>
    %202 = arith.subf %189, %201 : vector<16x32xf32>
    %cst_74 = arith.constant 9.99999997E-7 : f32
    %203 = vector.broadcast %cst_74 : f32 to vector<16x1xf32>
    %204 = arith.addf %200, %203 : vector<16x1xf32>
    %205 = math.rsqrt %204 : vector<16x1xf32>
    %206 = vector.broadcast %205 : vector<16x1xf32> to vector<16x32xf32>
    %207 = arith.mulf %202, %206 : vector<16x32xf32>
    %c0_75 = arith.constant 0 : index
    %c0_76 = arith.constant 0 : index
    %208 = vector.load %arg6[%c0_75, %c0_76] : memref<1x32xf32, #tpu.memory_space<vmem>>, vector<1x32xf32>
    %209 = vector.broadcast %208 : vector<1x32xf32> to vector<16x32xf32>
    %210 = arith.mulf %207, %209 : vector<16x32xf32>
    %c0_77 = arith.constant 0 : index
    %c0_78 = arith.constant 0 : index
    %211 = vector.load %arg7[%c0_77, %c0_78] : memref<1x32xf32, #tpu.memory_space<vmem>>, vector<1x32xf32>
    %212 = vector.broadcast %211 : vector<1x32xf32> to vector<16x32xf32>
    %213 = arith.addf %210, %212 : vector<16x32xf32>
    %c0_79 = arith.constant 0 : index
    %c0_80 = arith.constant 0 : index
    %214 = vector.load %arg8[%c0_79, %c0_80] : memref<32x64xf32, #tpu.memory_space<vmem>>, vector<32x64xf32>
    %cst_81 = arith.constant dense<0.000000e+00> : vector<16x64xf32>
    %215 = tpu.matmul %213, %214, %cst_81 {dimension_numbers = #tpu.dot_dimension_numbers<[1], [0], [0], [1], [0, 0, 1, 1], [], []>} : vector<16x32xf32>, vector<32x64xf32>, vector<16x64xf32> -> vector<16x64xf32>
    %c0_82 = arith.constant 0 : index
    %c0_83 = arith.constant 0 : index
    %216 = vector.load %arg9[%c0_82, %c0_83] : memref<1x64xf32, #tpu.memory_space<vmem>>, vector<1x64xf32>
    %217 = vector.broadcast %216 : vector<1x64xf32> to vector<16x64xf32>
    %218 = arith.addf %215, %217 : vector<16x64xf32>
    %cst_84 = arith.constant 0.000000e+00 : f32
    %219 = vector.broadcast %cst_84 : f32 to vector<16x64xf32>
    %220 = arith.maximumf %218, %219 : vector<16x64xf32>
    %c0_85 = arith.constant 0 : index
    %c0_86 = arith.constant 0 : index
    %221 = vector.load %arg10[%c0_85, %c0_86] : memref<64x32xf32, #tpu.memory_space<vmem>>, vector<64x32xf32>
    %cst_87 = arith.constant dense<0.000000e+00> : vector<16x32xf32>
    %222 = tpu.matmul %220, %221, %cst_87 {dimension_numbers = #tpu.dot_dimension_numbers<[1], [0], [0], [1], [0, 0, 1, 1], [], []>} : vector<16x64xf32>, vector<64x32xf32>, vector<16x32xf32> -> vector<16x32xf32>
    %c0_88 = arith.constant 0 : index
    %c0_89 = arith.constant 0 : index
    %223 = vector.load %arg11[%c0_88, %c0_89] : memref<1x32xf32, #tpu.memory_space<vmem>>, vector<1x32xf32>
    %224 = vector.broadcast %223 : vector<1x32xf32> to vector<16x32xf32>
    %225 = arith.addf %222, %224 : vector<16x32xf32>
    %226 = arith.addf %225, %213 : vector<16x32xf32>
    %cst_90 = arith.constant dense<0.000000e+00> : vector<16xf32>
    %227 = vector.multi_reduction <add>, %226, %cst_90 [1] : vector<16x32xf32> to vector<16xf32>
    %228 = vector.shape_cast %227 : vector<16xf32> to vector<16x1xf32>
    %cst_91 = arith.constant 3.200000e+01 : f32
    %229 = vector.broadcast %cst_91 : f32 to vector<16x1xf32>
    %230 = arith.divf %228, %229 : vector<16x1xf32>
    %231 = vector.broadcast %230 : vector<16x1xf32> to vector<16x32xf32>
    %232 = arith.subf %226, %231 : vector<16x32xf32>
    %233 = arith.mulf %232, %232 : vector<16x32xf32>
    %cst_92 = arith.constant dense<0.000000e+00> : vector<16xf32>
    %234 = vector.multi_reduction <add>, %233, %cst_92 [1] : vector<16x32xf32> to vector<16xf32>
    %235 = vector.shape_cast %234 : vector<16xf32> to vector<16x1xf32>
    %cst_93 = arith.constant 3.200000e+01 : f32
    %236 = vector.broadcast %cst_93 : f32 to vector<16x1xf32>
    %237 = arith.divf %235, %236 : vector<16x1xf32>
    %238 = vector.broadcast %230 : vector<16x1xf32> to vector<16x32xf32>
    %239 = arith.subf %226, %238 : vector<16x32xf32>
    %cst_94 = arith.constant 9.99999997E-7 : f32
    %240 = vector.broadcast %cst_94 : f32 to vector<16x1xf32>
    %241 = arith.addf %237, %240 : vector<16x1xf32>
    %242 = math.rsqrt %241 : vector<16x1xf32>
    %243 = vector.broadcast %242 : vector<16x1xf32> to vector<16x32xf32>
    %244 = arith.mulf %239, %243 : vector<16x32xf32>
    %c0_95 = arith.constant 0 : index
    %c0_96 = arith.constant 0 : index
    %245 = vector.load %arg12[%c0_95, %c0_96] : memref<1x32xf32, #tpu.memory_space<vmem>>, vector<1x32xf32>
    %246 = vector.broadcast %245 : vector<1x32xf32> to vector<16x32xf32>
    %247 = arith.mulf %244, %246 : vector<16x32xf32>
    %c0_97 = arith.constant 0 : index
    %c0_98 = arith.constant 0 : index
    %248 = vector.load %arg13[%c0_97, %c0_98] : memref<1x32xf32, #tpu.memory_space<vmem>>, vector<1x32xf32>
    %249 = vector.broadcast %248 : vector<1x32xf32> to vector<16x32xf32>
    %250 = arith.addf %247, %249 : vector<16x32xf32>
    %c0_99 = arith.constant 0 : index
    %c0_100 = arith.constant 0 : index
    %251 = vector.load %arg14[%c0_99, %c0_100] : memref<16x32xf32, #tpu.memory_space<vmem>>, vector<16x32xf32>
    tpu.vector_store %arg14[%c0_99, %c0_100], %250 {strides = array<i32>} : memref<16x32xf32, #tpu.memory_space<vmem>>, vector<16x32xf32>,
    return
  }
  func.func @transform_0(%arg0: i32) -> (i32, i32) {
    %c0_i32 = arith.constant 0 : i32
    %c0_i32_0 = arith.constant 0 : i32
    %c0_i32_1 = arith.constant 0 : i32
    return %c0_i32, %c0_i32_0 : i32, i32
  }
  func.func @transform_1(%arg0: i32) -> (i32, i32) {
    %c0_i32 = arith.constant 0 : i32
    %c0_i32_0 = arith.constant 0 : i32
    %c0_i32_1 = arith.constant 0 : i32
    return %c0_i32, %c0_i32_0 : i32, i32
  }
  func.func @transform_2(%arg0: i32) -> (i32, i32) {
    %c0_i32 = arith.constant 0 : i32
    %c0_i32_0 = arith.constant 0 : i32
    %c0_i32_1 = arith.constant 0 : i32
    return %c0_i32, %c0_i32_0 : i32, i32
  }
  func.func @transform_3(%arg0: i32) -> (i32, i32) {
    %c0_i32 = arith.constant 0 : i32
    %c0_i32_0 = arith.constant 0 : i32
    %c0_i32_1 = arith.constant 0 : i32
    return %c0_i32, %c0_i32_0 : i32, i32
  }
  func.func @transform_4(%arg0: i32) -> (i32, i32) {
    %c0_i32 = arith.constant 0 : i32
    %c0_i32_0 = arith.constant 0 : i32
    %c0_i32_1 = arith.constant 0 : i32
    return %c0_i32, %c0_i32_0 : i32, i32
  }
  func.func @transform_5(%arg0: i32) -> (i32, i32) {
    %c0_i32 = arith.constant 0 : i32
    %c0_i32_0 = arith.constant 0 : i32
    %c0_i32_1 = arith.constant 0 : i32
    return %c0_i32, %c0_i32_0 : i32, i32
  }
  func.func @transform_6(%arg0: i32) -> (i32, i32) {
    %c0_i32 = arith.constant 0 : i32
    %c0_i32_0 = arith.constant 0 : i32
    %c0_i32_1 = arith.constant 0 : i32
    return %c0_i32, %c0_i32_0 : i32, i32
  }
  func.func @transform_7(%arg0: i32) -> (i32, i32) {
    %c0_i32 = arith.constant 0 : i32
    %c0_i32_0 = arith.constant 0 : i32
    %c0_i32_1 = arith.constant 0 : i32
    return %c0_i32, %c0_i32_0 : i32, i32
  }
  func.func @transform_8(%arg0: i32) -> (i32, i32) {
    %c0_i32 = arith.constant 0 : i32
    %c0_i32_0 = arith.constant 0 : i32
    %c0_i32_1 = arith.constant 0 : i32
    return %c0_i32, %c0_i32_0 : i32, i32
  }
  func.func @transform_9(%arg0: i32) -> (i32, i32) {
    %c0_i32 = arith.constant 0 : i32
    %c0_i32_0 = arith.constant 0 : i32
    %c0_i32_1 = arith.constant 0 : i32
    return %c0_i32, %c0_i32_0 : i32, i32
  }
  func.func @transform_10(%arg0: i32) -> (i32, i32) {
    %c0_i32 = arith.constant 0 : i32
    %c0_i32_0 = arith.constant 0 : i32
    %c0_i32_1 = arith.constant 0 : i32
    return %c0_i32, %c0_i32_0 : i32, i32
  }
  func.func @transform_11(%arg0: i32) -> (i32, i32) {
    %c0_i32 = arith.constant 0 : i32
    %c0_i32_0 = arith.constant 0 : i32
    %c0_i32_1 = arith.constant 0 : i32
    return %c0_i32, %c0_i32_0 : i32, i32
  }
  func.func @transform_12(%arg0: i32) -> (i32, i32) {
    %c0_i32 = arith.constant 0 : i32
    %c0_i32_0 = arith.constant 0 : i32
    %c0_i32_1 = arith.constant 0 : i32
    return %c0_i32, %c0_i32_0 : i32, i32
  }
  func.func @transform_13(%arg0: i32) -> (i32, i32) {
    %c0_i32 = arith.constant 0 : i32
    %c0_i32_0 = arith.constant 0 : i32
    %c0_i32_1 = arith.constant 0 : i32
    return %c0_i32, %c0_i32_0 : i32, i32
  }
}

</mosaic_0001>

<llo_original>
// kernel: tpu_custom_call.1
$region0: #{tpu_custom_call.1}
  #allocation0 [shape = 'u32[]', space=smem, size = 0x4, offset = 0x4, fixed_abs, tag = 'smem constant byte address 0x4 - core index']
  #allocation1 [shape = 'u32[144,128]{1,0:T(1,128)}', space=vmem, size = 0x12000, scoped, tag = 'internal scratch']
  %s0 = inlined_call_operand.hbm [shape: f32[16,32], index: 0, kind: input, shape index: {}]
  %s1 = inlined_call_operand.vmem [shape: f32[32,96], index: 1, kind: input, shape index: {}]
  %s2 = inlined_call_operand.vmem [shape: f32[1,96], index: 2, kind: input, shape index: {}]
  %s3 = inlined_call_operand.vmem [shape: f32[32,32], index: 3, kind: input, shape index: {}]
  %s4 = inlined_call_operand.vmem [shape: f32[1,32], index: 4, kind: input, shape index: {}]
  %s5 = inlined_call_operand.hbm [shape: f32[1,32], index: 5, kind: input, shape index: {}]
  %s6 = inlined_call_operand.hbm [shape: f32[1,32], index: 6, kind: input, shape index: {}]
  %s7 = inlined_call_operand.vmem [shape: f32[32,64], index: 7, kind: input, shape index: {}]
  %s8 = inlined_call_operand.hbm [shape: f32[1,64], index: 8, kind: input, shape index: {}]
  %s9 = inlined_call_operand.vmem [shape: f32[64,32], index: 9, kind: input, shape index: {}]
  %s10 = inlined_call_operand.vmem [shape: f32[1,32], index: 10, kind: input, shape index: {}]
  %s11 = inlined_call_operand.vmem [shape: f32[1,32], index: 11, kind: input, shape index: {}]
  %s12 = inlined_call_operand.vmem [shape: f32[1,32], index: 12, kind: input, shape index: {}]
  %s13 = inlined_call_operand.hbm [shape: f32[16,32], index: 13, kind: output, shape index: {}]
  %s14 = sld [smem:[#allocation0]]
  $region78: #{tpu_custom_call.1} parent=0
    _
  %s16 = ssub.s32 1, %s14
  %s17 = scalar_select 0, %s16, %s14
  $region1: #{tpu_custom_call.1} parent=0
    #allocation2 [shape = 'u8[8192]{0}', space=vmem, size = 0x2000, scoped, tag = 'input window, operand 0, single buffered']
    #allocation3 [shape = 's32[1]{0}', space=sflag, size = 0x4, scoped, tag = 'scoped memory for tpu_custom_call.1']
    #allocation4 [shape = 's32[1]{0}', space=sflag, size = 0x4, scoped, tag = 'scoped memory for tpu_custom_call.1']
    #allocation5 [shape = 'u8[512]{0}', space=vmem, size = 0x400, scoped, tag = 'input window, operand 5, single buffered']
    #allocation6 [shape = 's32[1]{0}', space=sflag, size = 0x4, scoped, tag = 'scoped memory for tpu_custom_call.1']
    #allocation7 [shape = 'u8[512]{0}', space=vmem, size = 0x400, scoped, tag = 'input window, operand 6, single buffered']
    #allocation8 [shape = 'u8[512]{0}', space=vmem, size = 0x400, scoped, tag = 'input window, operand 8, single buffered']
    #allocation9 [shape = 's32[1]{0}', space=sflag, size = 0x4, scoped, tag = 'scoped memory for tpu_custom_call.1']
    #allocation10 [shape = 'u8[8192]{0}', space=vmem, size = 0x2000, scoped, tag = 'output window, operand 0, single buffered']
    %18 = vsyncpa [#allocation3], 0
    %19 = vsyncpa [#allocation6], 0
    %20 = vsyncpa [#allocation9], 0
    %21 = vsyncpa [#allocation4], 0
    // Predicated region
    $region2: #{tpu_custom_call.1} parent=1 // pred_check
      _
    $region3: #{tpu_custom_call.1} parent=1 // pred_check_branch
      %23 = sbr.rel (0) target = $region5
    $region4: #{tpu_custom_call.1} parent=1 // pred_region
      %s25 = ssub.s32 256, 256
      %26 = vsyncadd [#allocation3], %s25
      %s27 = sshll.u32 [#allocation2], 4
      %s28 = int_to_ptr.vmem [resolvable:$true] %s27
      %33 = dma.hbm_to_vmem [thread:$0]  %s0, 256, %s28, [#allocation3], 128, 128, 8
    $region5: #{tpu_custom_call.1} parent=1 // pred_fallthru
      _
    // Predicated region
    $region6: #{tpu_custom_call.1} parent=1 // pred_check
      _
    $region7: #{tpu_custom_call.1} parent=1 // pred_check_branch
      %35 = sbr.rel (0) target = $region9
    $region8: #{tpu_custom_call.1} parent=1 // pred_region
      _
    $region9: #{tpu_custom_call.1} parent=1 // pred_fallthru
      _
    // Predicated region
    $region10: #{tpu_custom_call.1} parent=1 // pred_check
      _
    $region11: #{tpu_custom_call.1} parent=1 // pred_check_branch
      %37 = sbr.rel (0) target = $region13
    $region12: #{tpu_custom_call.1} parent=1 // pred_region
      _
    $region13: #{tpu_custom_call.1} parent=1 // pred_fallthru
      _
    // Predicated region
    $region14: #{tpu_custom_call.1} parent=1 // pred_check
      _
    $region15: #{tpu_custom_call.1} parent=1 // pred_check_branch
      %39 = sbr.rel (0) target = $region17
    $region16: #{tpu_custom_call.1} parent=1 // pred_region
      _
    $region17: #{tpu_custom_call.1} parent=1 // pred_fallthru
      _
    // Predicated region
    $region18: #{tpu_custom_call.1} parent=1 // pred_check
      _
    $region19: #{tpu_custom_call.1} parent=1 // pred_check_branch
      %41 = sbr.rel (0) target = $region21
    $region20: #{tpu_custom_call.1} parent=1 // pred_region
      _
    $region21: #{tpu_custom_call.1} parent=1 // pred_fallthru
      _
    // Predicated region
    $region22: #{tpu_custom_call.1} parent=1 // pred_check
      _
    $region23: #{tpu_custom_call.1} parent=1 // pred_check_branch
      %43 = sbr.rel (0) target = $region25
    $region24: #{tpu_custom_call.1} parent=1 // pred_region
      %s45 = ssub.s32 16, 16
      %46 = vsyncadd [#allocation6], %s45
      %s48 = sshll.u32 [#allocation5], 4
      %s49 = int_to_ptr.vmem [resolvable:$true] %s48
      %51 = dma.hbm_to_vmem [thread:$0]  %s5, 16, %s49, [#allocation6]
    $region25: #{tpu_custom_call.1} parent=1 // pred_fallthru
      _
    // Predicated region
    $region26: #{tpu_custom_call.1} parent=1 // pred_check
      _
    $region27: #{tpu_custom_call.1} parent=1 // pred_check_branch
      %53 = sbr.rel (0) target = $region29
    $region28: #{tpu_custom_call.1} parent=1 // pred_region
      %s55 = ssub.s32 16, 16
      %56 = vsyncadd [#allocation6], %s55
      %s58 = sshll.u32 [#allocation7], 4
      %s59 = int_to_ptr.vmem [resolvable:$true] %s58
      %61 = dma.hbm_to_vmem [thread:$0]  %s6, 16, %s59, [#allocation6]
    $region29: #{tpu_custom_call.1} parent=1 // pred_fallthru
      _
    // Predicated region
    $region30: #{tpu_custom_call.1} parent=1 // pred_check
      _
    $region31: #{tpu_custom_call.1} parent=1 // pred_check_branch
      %63 = sbr.rel (0) target = $region33
    $region32: #{tpu_custom_call.1} parent=1 // pred_region
      _
    $region33: #{tpu_custom_call.1} parent=1 // pred_fallthru
      _
    // Predicated region
    $region34: #{tpu_custom_call.1} parent=1 // pred_check
      _
    $region35: #{tpu_custom_call.1} parent=1 // pred_check_branch
      %65 = sbr.rel (0) target = $region37
    $region36: #{tpu_custom_call.1} parent=1 // pred_region
      %s67 = ssub.s32 16, 16
      %68 = vsyncadd [#allocation9], %s67
      %s70 = sshll.u32 [#allocation8], 4
      %s71 = int_to_ptr.vmem [resolvable:$true] %s70
      %73 = dma.hbm_to_vmem [thread:$0]  %s8, 16, %s71, [#allocation9]
    $region37: #{tpu_custom_call.1} parent=1 // pred_fallthru
      _
    // Predicated region
    $region38: #{tpu_custom_call.1} parent=1 // pred_check
      _
    $region39: #{tpu_custom_call.1} parent=1 // pred_check_branch
      %75 = sbr.rel (0) target = $region41
    $region40: #{tpu_custom_call.1} parent=1 // pred_region
      _
    $region41: #{tpu_custom_call.1} parent=1 // pred_fallthru
      _
    // Predicated region
    $region42: #{tpu_custom_call.1} parent=1 // pred_check
      _
    $region43: #{tpu_custom_call.1} parent=1 // pred_check_branch
      %77 = sbr.rel (0) target = $region45
    $region44: #{tpu_custom_call.1} parent=1 // pred_region
      _
    $region45: #{tpu_custom_call.1} parent=1 // pred_fallthru
      _
    // Predicated region
    $region46: #{tpu_custom_call.1} parent=1 // pred_check
      _
    $region47: #{tpu_custom_call.1} parent=1 // pred_check_branch
      %79 = sbr.rel (0) target = $region49
    $region48: #{tpu_custom_call.1} parent=1 // pred_region
      _
    $region49: #{tpu_custom_call.1} parent=1 // pred_fallthru
      _
    // Predicated region
    $region50: #{tpu_custom_call.1} parent=1 // pred_check
      _
    $region51: #{tpu_custom_call.1} parent=1 // pred_check_branch
      %81 = sbr.rel (0) target = $region53
    $region52: #{tpu_custom_call.1} parent=1 // pred_region
      _
    $region53: #{tpu_custom_call.1} parent=1 // pred_fallthru
      _
    // Predicated region
    $region54: #{tpu_custom_call.1} parent=1 // pred_check
      _
    $region55: #{tpu_custom_call.1} parent=1 // pred_check_branch
      %83 = sbr.rel (0) target = $region57
    $region56: #{tpu_custom_call.1} parent=1 // pred_region
      %84 = dma.done [#allocation3], 256
    $region57: #{tpu_custom_call.1} parent=1 // pred_fallthru
      _
    // Predicated region
    $region58: #{tpu_custom_call.1} parent=1 // pred_check
      _
    $region59: #{tpu_custom_call.1} parent=1 // pred_check_branch
      %86 = sbr.rel (0) target = $region61
    $region60: #{tpu_custom_call.1} parent=1 // pred_region
      %87 = dma.done [#allocation6], 16
    $region61: #{tpu_custom_call.1} parent=1 // pred_fallthru
      _
    // Predicated region
    $region62: #{tpu_custom_call.1} parent=1 // pred_check
      _
    $region63: #{tpu_custom_call.1} parent=1 // pred_check_branch
      %89 = sbr.rel (0) target = $region65
    $region64: #{tpu_custom_call.1} parent=1 // pred_region
      %90 = dma.done [#allocation6], 16
    $region65: #{tpu_custom_call.1} parent=1 // pred_fallthru
      _
    // Predicated region
    $region66: #{tpu_custom_call.1} parent=1 // pred_check
      _
    $region67: #{tpu_custom_call.1} parent=1 // pred_check_branch
      %92 = sbr.rel (0) target = $region69
    $region68: #{tpu_custom_call.1} parent=1 // pred_region
      %93 = dma.done [#allocation9], 16
    $region69: #{tpu_custom_call.1} parent=1 // pred_fallthru
      _
    %v94 = vld [vmem:[#allocation2] sm:$0xff]
    %v95 = vld [vmem:[#allocation2 + $0x8] sm:$0xff]
    %v96 = vld [vmem:[%s1] sm:$0xff]
    %v97 = vld [vmem:[%s1 + $0x8] sm:$0xff]
    %v98 = vld [vmem:[%s1 + $0x10] sm:$0xff]
    %v99 = vld [vmem:[%s1 + $0x18] sm:$0xff]
    %v100 = vld [vmem:[%s2] sm:$0x1]
    %v102 = vlaneseq
    %v103 = vshrl.u32 %v102, 7
    %v104 = vsub.s32 0, %v103
    %v105 = vrot.slane %v100, %v104
    %vm107 = vcmask 261120
    %v109 = vsel %vm107, %v94, 0
    %v112 = vsel %vm107, %v95, 0
    %114 = vmatprep.subr.mxu0 0.0
    %115 = vmatpush1.msra.mxu0 %v96
    %116 = vmatprep.subr.mxu0 0.0
    %117 = vmatpush1.msra.mxu0 %v97
    %118 = vmatprep.subr.mxu0 0.0
    %119 = vmatpush1.msra.mxu0 %v98
    %120 = vmatprep.subr.mxu0 0.0
    %121 = vmatpush1.msra.mxu0 %v99
    %122 = vmatprep.subr.mxu0 0.0
    %123 = vmatpush1.msra.mxu0 0.0
    %124 = vmatprep.subr.mxu0 0.0
    %125 = vmatpush1.msra.mxu0 0.0
    %126 = vmatprep.subr.mxu0 0.0
    %127 = vmatpush1.msra.mxu0 0.0
    %128 = vmatprep.subr.mxu0 0.0
    %129 = vmatpush1.msra.mxu0 0.0
    %130 = vmatprep.subr.mxu0 0.0
    %131 = vmatpush1.msra.mxu0 0.0
    %132 = vmatprep.subr.mxu0 0.0
    %133 = vmatpush1.msra.mxu0 0.0
    %134 = vmatprep.subr.mxu0 0.0
    %135 = vmatpush1.msra.mxu0 0.0
    %136 = vmatprep.subr.mxu0 0.0
    %137 = vmatpush1.msra.mxu0 0.0
    %138 = vmatprep.subr.mxu0 0.0
    %139 = vmatpush1.msra.mxu0 0.0
    %140 = vmatprep.subr.mxu0 0.0
    %141 = vmatpush1.msra.mxu0 0.0
    %142 = vmatprep.subr.mxu0 0.0
    %143 = vmatpush1.msra.mxu0 0.0
    %144 = vmatprep.subr.mxu0 0.0
    %145 = vmatpush1.msra.mxu0 0.0
    %146 = vmatprep.subr.mxu0 0.0
    %147 = vmatpush1.msra.mxu0 0.0
    %148 = vmatprep.subr.mxu0 0.0
    %149 = vmatpush1.msra.mxu0 0.0
    %150 = vmatprep.subr.mxu0 0.0
    %151 = vmatpush1.msra.mxu0 0.0
    %152 = vmatprep.subr.mxu0 0.0
    %153 = vmatpush1.msra.mxu0 0.0
    %154 = vmatprep.subr.mxu0 0.0
    %155 = vmatpush1.msra.mxu0 0.0
    %156 = vmatprep.subr.mxu0 0.0
    %157 = vmatpush1.msra.mxu0 0.0
    %158 = vmatprep.subr.mxu0 0.0
    %159 = vmatpush1.msra.mxu0 0.0
    %160 = vmatprep.subr.mxu0 0.0
    %161 = vmatpush1.msra.mxu0 0.0
    %162 = vmatprep.subr.mxu0 0.0
    %163 = vmatpush1.msra.mxu0 0.0
    %164 = vmatprep.subr.mxu0 0.0
    %165 = vmatpush1.msra.mxu0 0.0
    %166 = vmatprep.subr.mxu0 0.0
    %167 = vmatpush1.msra.mxu0 0.0
    %168 = vmatprep.subr.mxu0 0.0
    %169 = vmatpush1.msra.mxu0 0.0
    %170 = vmatprep.subr.mxu0 0.0
    %171 = vmatpush1.msra.mxu0 0.0
    %172 = vmatprep.subr.mxu0 0.0
    %173 = vmatpush1.msra.mxu0 0.0
    %174 = vmatprep.subr.mxu0 0.0
    %175 = vmatpush1.msra.mxu0 0.0
    %176 = vmatprep.subr.mxu0 0.0
    %177 = vmatpush1.msra.mxu0 0.0
    %178 = vmatprep.mubr.f32.mxu0 0.0
    %179 = vmatmul.mubr.f32.gmra.mrb[0].mxu0 %v109
    %v180 = vpop.f32.mrb[0].mxu0
    %v181 = vadd.f32 %v105, %v180
    %v182 = vpop.f32.mrb[0].mxu0
    %183 = vmatprep.mubr.f32.mxu0 0.0
    %184 = vmatmul.mubr.f32.gmra.mrb[0].mxu0 %v112
    %v185 = vpop.f32.mrb[0].mxu0
    %v186 = vadd.f32 %v105, %v185
    %v187 = vpop.f32.mrb[0].mxu0
    %188 = vdwg.mxu0
    %190 = vrot.lane.b32.xlu0 %v181, 96
    %v191 = vpop.permute.xlu0 %190
    %vm192 = vcmask 64512
    %v193 = vsel %vm192, %v181, 0
    %v195 = vsel %vm192, %v191, 0
    %197 = vmatprep.subr.mxu0 0.0
    %198 = vmatpush1.xpose.msra.mxu0 %v195
    %199 = vmatprep.subr.mxu0 0.0
    %200 = vmatpush1.xpose.msra.mxu0 0.0
    %201 = vmatprep.subr.mxu0 0.0
    %202 = vmatpush1.xpose.msra.mxu0 0.0
    %203 = vmatprep.subr.mxu0 0.0
    %204 = vmatpush1.xpose.msra.mxu0 0.0
    %205 = vmatprep.subr.mxu0 0.0
    %206 = vmatpush1.xpose.msra.mxu0 0.0
    %207 = vmatprep.subr.mxu0 0.0
    %208 = vmatpush1.xpose.msra.mxu0 0.0
    %209 = vmatprep.subr.mxu0 0.0
    %210 = vmatpush1.xpose.msra.mxu0 0.0
    %211 = vmatprep.subr.mxu0 0.0
    %212 = vmatpush1.xpose.msra.mxu0 0.0
    %213 = vmatprep.subr.mxu0 0.0
    %214 = vmatpush1.xpose.msra.mxu0 0.0
    %215 = vmatprep.subr.mxu0 0.0
    %216 = vmatpush1.xpose.msra.mxu0 0.0
    %217 = vmatprep.subr.mxu0 0.0
    %218 = vmatpush1.xpose.msra.mxu0 0.0
    %219 = vmatprep.subr.mxu0 0.0
    %220 = vmatpush1.xpose.msra.mxu0 0.0
    %221 = vmatprep.subr.mxu0 0.0
    %222 = vmatpush1.xpose.msra.mxu0 0.0
    %223 = vmatprep.subr.mxu0 0.0
    %224 = vmatpush1.xpose.msra.mxu0 0.0
    %225 = vmatprep.subr.mxu0 0.0
    %226 = vmatpush1.xpose.msra.mxu0 0.0
    %227 = vmatprep.subr.mxu0 0.0
    %228 = vmatpush1.xpose.msra.mxu0 0.0
    %229 = vmatprep.subr.mxu0 0.0
    %230 = vmatpush1.xpose.msra.mxu0 0.0
    %231 = vmatprep.subr.mxu0 0.0
    %232 = vmatpush1.xpose.msra.mxu0 0.0
    %233 = vmatprep.subr.mxu0 0.0
    %234 = vmatpush1.xpose.msra.mxu0 0.0
    %235 = vmatprep.subr.mxu0 0.0
    %236 = vmatpush1.xpose.msra.mxu0 0.0
    %237 = vmatprep.subr.mxu0 0.0
    %238 = vmatpush1.xpose.msra.mxu0 0.0
    %239 = vmatprep.subr.mxu0 0.0
    %240 = vmatpush1.xpose.msra.mxu0 0.0
    %241 = vmatprep.subr.mxu0 0.0
    %242 = vmatpush1.xpose.msra.mxu0 0.0
    %243 = vmatprep.subr.mxu0 0.0
    %244 = vmatpush1.xpose.msra.mxu0 0.0
    %245 = vmatprep.subr.mxu0 0.0
    %246 = vmatpush1.xpose.msra.mxu0 0.0
    %247 = vmatprep.subr.mxu0 0.0
    %248 = vmatpush1.xpose.msra.mxu0 0.0
    %249 = vmatprep.subr.mxu0 0.0
    %250 = vmatpush1.xpose.msra.mxu0 0.0
    %251 = vmatprep.subr.mxu0 0.0
    %252 = vmatpush1.xpose.msra.mxu0 0.0
    %253 = vmatprep.subr.mxu0 0.0
    %254 = vmatpush1.xpose.msra.mxu0 0.0
    %255 = vmatprep.subr.mxu0 0.0
    %256 = vmatpush1.xpose.msra.mxu0 0.0
    %257 = vmatprep.subr.mxu0 0.0
    %258 = vmatpush1.xpose.msra.mxu0 0.0
    %259 = vmatprep.subr.mxu0 0.0
    %260 = vmatpush1.xpose.msra.mxu0 0.0
    %261 = vmatprep.mubr.f32.mxu0 0.0
    %262 = vmatmul.mubr.f32.gmra.mrb[0].mxu0 %v193
    %v263 = vpop.f32.mrb[0].mxu0
    %v264 = vadd.f32 0.0, %v263
    %v265 = vpop.f32.mrb[0].mxu0
    %266 = vdwg.mxu0
    %v267 = vmul.f32 %v264, 0.35355338
    %v268 = vsel %vm192, %v267, -inf
    %269 = vmax.xlane.f32.xlu0 %v268
    %v270 = vpop.xlane.xlu0 %269
    %v271 = vsub.f32 %v267, %v270
    %v272 = vmul.f32 %v271, 1.442695
    %v273 = vpow.pop %v272
    %v274 = vsel %vm192, %v273, 0.0
    %275 = vadd.xlane.f32.xlu0 %v274
    %v276 = vpop.xlane.xlu0 %275
    %v277 = vrcp.pop %v276
    %v278 = vmul.f32 %v273, %v277
    %279 = vrot.lane.b32.xlu0 %v181, 64
    %v280 = vpop.permute.xlu0 %279
    %v283 = vsel %vm192, %v278, 0
    %285 = vmatprep.subr.mxu0 0.0
    %286 = vmatpush1.msra.mxu0 %v280
    %287 = vmatprep.subr.mxu0 0.0
    %288 = vmatpush1.msra.mxu0 0.0
    %289 = vmatprep.subr.mxu0 0.0
    %290 = vmatpush1.msra.mxu0 0.0
    %291 = vmatprep.subr.mxu0 0.0
    %292 = vmatpush1.msra.mxu0 0.0
    %293 = vmatprep.subr.mxu0 0.0
    %294 = vmatpush1.msra.mxu0 0.0
    %295 = vmatprep.subr.mxu0 0.0
    %296 = vmatpush1.msra.mxu0 0.0
    %297 = vmatprep.subr.mxu0 0.0
    %298 = vmatpush1.msra.mxu0 0.0
    %299 = vmatprep.subr.mxu0 0.0
    %300 = vmatpush1.msra.mxu0 0.0
    %301 = vmatprep.subr.mxu0 0.0
    %302 = vmatpush1.msra.mxu0 0.0
    %303 = vmatprep.subr.mxu0 0.0
    %304 = vmatpush1.msra.mxu0 0.0
    %305 = vmatprep.subr.mxu0 0.0
    %306 = vmatpush1.msra.mxu0 0.0
    %307 = vmatprep.subr.mxu0 0.0
    %308 = vmatpush1.msra.mxu0 0.0
    %309 = vmatprep.subr.mxu0 0.0
    %310 = vmatpush1.msra.mxu0 0.0
    %311 = vmatprep.subr.mxu0 0.0
    %312 = vmatpush1.msra.mxu0 0.0
    %313 = vmatprep.subr.mxu0 0.0
    %314 = vmatpush1.msra.mxu0 0.0
    %315 = vmatprep.subr.mxu0 0.0
    %316 = vmatpush1.msra.mxu0 0.0
    %317 = vmatprep.subr.mxu0 0.0
    %318 = vmatpush1.msra.mxu0 0.0
    %319 = vmatprep.subr.mxu0 0.0
    %320 = vmatpush1.msra.mxu0 0.0
    %321 = vmatprep.subr.mxu0 0.0
    %322 = vmatpush1.msra.mxu0 0.0
    %323 = vmatprep.subr.mxu0 0.0
    %324 = vmatpush1.msra.mxu0 0.0
    %325 = vmatprep.subr.mxu0 0.0
    %326 = vmatpush1.msra.mxu0 0.0
    %327 = vmatprep.subr.mxu0 0.0
    %328 = vmatpush1.msra.mxu0 0.0
    %329 = vmatprep.subr.mxu0 0.0
    %330 = vmatpush1.msra.mxu0 0.0
    %331 = vmatprep.subr.mxu0 0.0
    %332 = vmatpush1.msra.mxu0 0.0
    %333 = vmatprep.subr.mxu0 0.0
    %334 = vmatpush1.msra.mxu0 0.0
    %335 = vmatprep.subr.mxu0 0.0
    %336 = vmatpush1.msra.mxu0 0.0
    %337 = vmatprep.subr.mxu0 0.0
    %338 = vmatpush1.msra.mxu0 0.0
    %339 = vmatprep.subr.mxu0 0.0
    %340 = vmatpush1.msra.mxu0 0.0
    %341 = vmatprep.subr.mxu0 0.0
    %342 = vmatpush1.msra.mxu0 0.0
    %343 = vmatprep.subr.mxu0 0.0
    %344 = vmatpush1.msra.mxu0 0.0
    %345 = vmatprep.subr.mxu0 0.0
    %346 = vmatpush1.msra.mxu0 0.0
    %347 = vmatprep.subr.mxu0 0.0
    %348 = vmatpush1.msra.mxu0 0.0
    %349 = vmatprep.mubr.f32.mxu0 0.0
    %350 = vmatmul.mubr.f32.gmra.mrb[0].mxu0 %v283
    %v351 = vpop.f32.mrb[0].mxu0
    %v352 = vadd.f32 0.0, %v351
    %v353 = vpop.f32.mrb[0].mxu0
    %354 = vdwg.mxu0
    %v355 = vld [vmem:[%s3] sm:$0xff]
    %356 = vrot.lane.b32.xlu0 %v181, 120
    %v357 = vpop.permute.xlu0 %356
    %358 = vrot.lane.b32.xlu0 %v181, 88
    %v359 = vpop.permute.xlu0 %358
    %v360 = vsel %vm192, %v357, 0
    %v362 = vsel %vm192, %v359, 0
    %364 = vmatprep.subr.mxu0 0.0
    %365 = vmatpush1.xpose.msra.mxu0 %v362
    %366 = vmatprep.subr.mxu0 0.0
    %367 = vmatpush1.xpose.msra.mxu0 0.0
    %368 = vmatprep.subr.mxu0 0.0
    %369 = vmatpush1.xpose.msra.mxu0 0.0
    %370 = vmatprep.subr.mxu0 0.0
    %371 = vmatpush1.xpose.msra.mxu0 0.0
    %372 = vmatprep.subr.mxu0 0.0
    %373 = vmatpush1.xpose.msra.mxu0 0.0
    %374 = vmatprep.subr.mxu0 0.0
    %375 = vmatpush1.xpose.msra.mxu0 0.0
    %376 = vmatprep.subr.mxu0 0.0
    %377 = vmatpush1.xpose.msra.mxu0 0.0
    %378 = vmatprep.subr.mxu0 0.0
    %379 = vmatpush1.xpose.msra.mxu0 0.0
    %380 = vmatprep.subr.mxu0 0.0
    %381 = vmatpush1.xpose.msra.mxu0 0.0
    %382 = vmatprep.subr.mxu0 0.0
    %383 = vmatpush1.xpose.msra.mxu0 0.0
    %384 = vmatprep.subr.mxu0 0.0
    %385 = vmatpush1.xpose.msra.mxu0 0.0
    %386 = vmatprep.subr.mxu0 0.0
    %387 = vmatpush1.xpose.msra.mxu0 0.0
    %388 = vmatprep.subr.mxu0 0.0
    %389 = vmatpush1.xpose.msra.mxu0 0.0
    %390 = vmatprep.subr.mxu0 0.0
    %391 = vmatpush1.xpose.msra.mxu0 0.0
    %392 = vmatprep.subr.mxu0 0.0
    %393 = vmatpush1.xpose.msra.mxu0 0.0
    %394 = vmatprep.subr.mxu0 0.0
    %395 = vmatpush1.xpose.msra.mxu0 0.0
    %396 = vmatprep.subr.mxu0 0.0
    %397 = vmatpush1.xpose.msra.mxu0 0.0
    %398 = vmatprep.subr.mxu0 0.0
    %399 = vmatpush1.xpose.msra.mxu0 0.0
    %400 = vmatprep.subr.mxu0 0.0
    %401 = vmatpush1.xpose.msra.mxu0 0.0
    %402 = vmatprep.subr.mxu0 0.0
    %403 = vmatpush1.xpose.msra.mxu0 0.0
    %404 = vmatprep.subr.mxu0 0.0
    %405 = vmatpush1.xpose.msra.mxu0 0.0
    %406 = vmatprep.subr.mxu0 0.0
    %407 = vmatpush1.xpose.msra.mxu0 0.0
    %408 = vmatprep.subr.mxu0 0.0
    %409 = vmatpush1.xpose.msra.mxu0 0.0
    %410 = vmatprep.subr.mxu0 0.0
    %411 = vmatpush1.xpose.msra.mxu0 0.0
    %412 = vmatprep.subr.mxu0 0.0
    %413 = vmatpush1.xpose.msra.mxu0 0.0
    %414 = vmatprep.subr.mxu0 0.0
    %415 = vmatpush1.xpose.msra.mxu0 0.0
    %416 = vmatprep.subr.mxu0 0.0
    %417 = vmatpush1.xpose.msra.mxu0 0.0
    %418 = vmatprep.subr.mxu0 0.0
    %419 = vmatpush1.xpose.msra.mxu0 0.0
    %420 = vmatprep.subr.mxu0 0.0
    %421 = vmatpush1.xpose.msra.mxu0 0.0
    %422 = vmatprep.subr.mxu0 0.0
    %423 = vmatpush1.xpose.msra.mxu0 0.0
    %424 = vmatprep.subr.mxu0 0.0
    %425 = vmatpush1.xpose.msra.mxu0 0.0
    %426 = vmatprep.subr.mxu0 0.0
    %427 = vmatpush1.xpose.msra.mxu0 0.0
    %428 = vmatprep.mubr.f32.mxu0 0.0
    %429 = vmatmul.mubr.f32.gmra.mrb[0].mxu0 %v360
    %v430 = vpop.f32.mrb[0].mxu0
    %v431 = vadd.f32 0.0, %v430
    %v432 = vpop.f32.mrb[0].mxu0
    %433 = vdwg.mxu0
    %v434 = vmul.f32 %v431, 0.35355338
    %v435 = vsel %vm192, %v434, -inf
    %436 = vmax.xlane.f32.xlu0 %v435
    %v437 = vpop.xlane.xlu0 %436
    %v438 = vsub.f32 %v434, %v437
    %v439 = vmul.f32 %v438, 1.442695
    %v440 = vpow.pop %v439
    %v441 = vsel %vm192, %v440, 0.0
    %442 = vadd.xlane.f32.xlu0 %v441
    %v443 = vpop.xlane.xlu0 %442
    %v444 = vrcp.pop %v443
    %v445 = vmul.f32 %v440, %v444
    %446 = vrot.lane.b32.xlu0 %v181, 56
    %v447 = vpop.permute.xlu0 %446
    %v450 = vsel %vm192, %v445, 0
    %452 = vmatprep.subr.mxu0 0.0
    %453 = vmatpush1.msra.mxu0 %v447
    %454 = vmatprep.subr.mxu0 0.0
    %455 = vmatpush1.msra.mxu0 0.0
    %456 = vmatprep.subr.mxu0 0.0
    %457 = vmatpush1.msra.mxu0 0.0
    %458 = vmatprep.subr.mxu0 0.0
    %459 = vmatpush1.msra.mxu0 0.0
    %460 = vmatprep.subr.mxu0 0.0
    %461 = vmatpush1.msra.mxu0 0.0
    %462 = vmatprep.subr.mxu0 0.0
    %463 = vmatpush1.msra.mxu0 0.0
    %464 = vmatprep.subr.mxu0 0.0
    %465 = vmatpush1.msra.mxu0 0.0
    %466 = vmatprep.subr.mxu0 0.0
    %467 = vmatpush1.msra.mxu0 0.0
    %468 = vmatprep.subr.mxu0 0.0
    %469 = vmatpush1.msra.mxu0 0.0
    %470 = vmatprep.subr.mxu0 0.0
    %471 = vmatpush1.msra.mxu0 0.0
    %472 = vmatprep.subr.mxu0 0.0
    %473 = vmatpush1.msra.mxu0 0.0
    %474 = vmatprep.subr.mxu0 0.0
    %475 = vmatpush1.msra.mxu0 0.0
    %476 = vmatprep.subr.mxu0 0.0
    %477 = vmatpush1.msra.mxu0 0.0
    %478 = vmatprep.subr.mxu0 0.0
    %479 = vmatpush1.msra.mxu0 0.0
    %480 = vmatprep.subr.mxu0 0.0
    %481 = vmatpush1.msra.mxu0 0.0
    %482 = vmatprep.subr.mxu0 0.0
    %483 = vmatpush1.msra.mxu0 0.0
    %484 = vmatprep.subr.mxu0 0.0
    %485 = vmatpush1.msra.mxu0 0.0
    %486 = vmatprep.subr.mxu0 0.0
    %487 = vmatpush1.msra.mxu0 0.0
    %488 = vmatprep.subr.mxu0 0.0
    %489 = vmatpush1.msra.mxu0 0.0
    %490 = vmatprep.subr.mxu0 0.0
    %491 = vmatpush1.msra.mxu0 0.0
    %492 = vmatprep.subr.mxu0 0.0
    %493 = vmatpush1.msra.mxu0 0.0
    %494 = vmatprep.subr.mxu0 0.0
    %495 = vmatpush1.msra.mxu0 0.0
    %496 = vmatprep.subr.mxu0 0.0
    %497 = vmatpush1.msra.mxu0 0.0
    %498 = vmatprep.subr.mxu0 0.0
    %499 = vmatpush1.msra.mxu0 0.0
    %500 = vmatprep.subr.mxu0 0.0
    %501 = vmatpush1.msra.mxu0 0.0
    %502 = vmatprep.subr.mxu0 0.0
    %503 = vmatpush1.msra.mxu0 0.0
    %504 = vmatprep.subr.mxu0 0.0
    %505 = vmatpush1.msra.mxu0 0.0
    %506 = vmatprep.subr.mxu0 0.0
    %507 = vmatpush1.msra.mxu0 0.0
    %508 = vmatprep.subr.mxu0 0.0
    %509 = vmatpush1.msra.mxu0 0.0
    %510 = vmatprep.subr.mxu0 0.0
    %511 = vmatpush1.msra.mxu0 0.0
    %512 = vmatprep.subr.mxu0 0.0
    %513 = vmatpush1.msra.mxu0 0.0
    %514 = vmatprep.subr.mxu0 0.0
    %515 = vmatpush1.msra.mxu0 0.0
    %516 = vmatprep.mubr.f32.mxu0 0.0
    %517 = vmatmul.mubr.f32.gmra.mrb[0].mxu0 %v450
    %v518 = vpop.f32.mrb[0].mxu0
    %v519 = vadd.f32 0.0, %v518
    %v520 = vpop.f32.mrb[0].mxu0
    %521 = vdwg.mxu0
    %v522 = vld [vmem:[%s3 + $0x8] sm:$0xff]
    %v524 = vsel %vm192, %v519, 0
    %526 = vmatprep.subr.mxu0 0.0
    %527 = vmatpush1.msra.mxu0 %v522
    %528 = vmatprep.subr.mxu0 0.0
    %529 = vmatpush1.msra.mxu0 0.0
    %530 = vmatprep.subr.mxu0 0.0
    %531 = vmatpush1.msra.mxu0 0.0
    %532 = vmatprep.subr.mxu0 0.0
    %533 = vmatpush1.msra.mxu0 0.0
    %534 = vmatprep.subr.mxu0 0.0
    %535 = vmatpush1.msra.mxu0 0.0
    %536 = vmatprep.subr.mxu0 0.0
    %537 = vmatpush1.msra.mxu0 0.0
    %538 = vmatprep.subr.mxu0 0.0
    %539 = vmatpush1.msra.mxu0 0.0
    %540 = vmatprep.subr.mxu0 0.0
    %541 = vmatpush1.msra.mxu0 0.0
    %542 = vmatprep.subr.mxu0 0.0
    %543 = vmatpush1.msra.mxu0 0.0
    %544 = vmatprep.subr.mxu0 0.0
    %545 = vmatpush1.msra.mxu0 0.0
    %546 = vmatprep.subr.mxu0 0.0
    %547 = vmatpush1.msra.mxu0 0.0
    %548 = vmatprep.subr.mxu0 0.0
    %549 = vmatpush1.msra.mxu0 0.0
    %550 = vmatprep.subr.mxu0 0.0
    %551 = vmatpush1.msra.mxu0 0.0
    %552 = vmatprep.subr.mxu0 0.0
    %553 = vmatpush1.msra.mxu0 0.0
    %554 = vmatprep.subr.mxu0 0.0
    %555 = vmatpush1.msra.mxu0 0.0
    %556 = vmatprep.subr.mxu0 0.0
    %557 = vmatpush1.msra.mxu0 0.0
    %558 = vmatprep.subr.mxu0 0.0
    %559 = vmatpush1.msra.mxu0 0.0
    %560 = vmatprep.subr.mxu0 0.0
    %561 = vmatpush1.msra.mxu0 0.0
    %562 = vmatprep.subr.mxu0 0.0
    %563 = vmatpush1.msra.mxu0 0.0
    %564 = vmatprep.subr.mxu0 0.0
    %565 = vmatpush1.msra.mxu0 0.0
    %566 = vmatprep.subr.mxu0 0.0
    %567 = vmatpush1.msra.mxu0 0.0
    %568 = vmatprep.subr.mxu0 0.0
    %569 = vmatpush1.msra.mxu0 0.0
    %570 = vmatprep.subr.mxu0 0.0
    %571 = vmatpush1.msra.mxu0 0.0
    %572 = vmatprep.subr.mxu0 0.0
    %573 = vmatpush1.msra.mxu0 0.0
    %574 = vmatprep.subr.mxu0 0.0
    %575 = vmatpush1.msra.mxu0 0.0
    %576 = vmatprep.subr.mxu0 0.0
    %577 = vmatpush1.msra.mxu0 0.0
    %578 = vmatprep.subr.mxu0 0.0
    %579 = vmatpush1.msra.mxu0 0.0
    %580 = vmatprep.subr.mxu0 0.0
    %581 = vmatpush1.msra.mxu0 0.0
    %582 = vmatprep.subr.mxu0 0.0
    %583 = vmatpush1.msra.mxu0 0.0
    %584 = vmatprep.subr.mxu0 0.0
    %585 = vmatpush1.msra.mxu0 0.0
    %586 = vmatprep.subr.mxu0 0.0
    %587 = vmatpush1.msra.mxu0 0.0
    %588 = vmatprep.subr.mxu0 0.0
    %589 = vmatpush1.msra.mxu0 0.0
    %590 = vmatprep.mubr.f32.mxu0 0.0
    %591 = vmatmul.mubr.f32.gmra.mrb[0].mxu0 %v524
    %v592 = vpop.f32.mrb[0].mxu0
    %v593 = vadd.f32 0.0, %v592
    %v594 = vpop.f32.mrb[0].mxu0
    %595 = vdwg.mxu0
    %v597 = vsel %vm192, %v352, 0
    %599 = vmatprep.subr.mxu0 0.0
    %600 = vmatpush1.msra.mxu0 %v355
    %601 = vmatprep.subr.mxu0 0.0
    %602 = vmatpush1.msra.mxu0 0.0
    %603 = vmatprep.subr.mxu0 0.0
    %604 = vmatpush1.msra.mxu0 0.0
    %605 = vmatprep.subr.mxu0 0.0
    %606 = vmatpush1.msra.mxu0 0.0
    %607 = vmatprep.subr.mxu0 0.0
    %608 = vmatpush1.msra.mxu0 0.0
    %609 = vmatprep.subr.mxu0 0.0
    %610 = vmatpush1.msra.mxu0 0.0
    %611 = vmatprep.subr.mxu0 0.0
    %612 = vmatpush1.msra.mxu0 0.0
    %613 = vmatprep.subr.mxu0 0.0
    %614 = vmatpush1.msra.mxu0 0.0
    %615 = vmatprep.subr.mxu0 0.0
    %616 = vmatpush1.msra.mxu0 0.0
    %617 = vmatprep.subr.mxu0 0.0
    %618 = vmatpush1.msra.mxu0 0.0
    %619 = vmatprep.subr.mxu0 0.0
    %620 = vmatpush1.msra.mxu0 0.0
    %621 = vmatprep.subr.mxu0 0.0
    %622 = vmatpush1.msra.mxu0 0.0
    %623 = vmatprep.subr.mxu0 0.0
    %624 = vmatpush1.msra.mxu0 0.0
    %625 = vmatprep.subr.mxu0 0.0
    %626 = vmatpush1.msra.mxu0 0.0
    %627 = vmatprep.subr.mxu0 0.0
    %628 = vmatpush1.msra.mxu0 0.0
    %629 = vmatprep.subr.mxu0 0.0
    %630 = vmatpush1.msra.mxu0 0.0
    %631 = vmatprep.subr.mxu0 0.0
    %632 = vmatpush1.msra.mxu0 0.0
    %633 = vmatprep.subr.mxu0 0.0
    %634 = vmatpush1.msra.mxu0 0.0
    %635 = vmatprep.subr.mxu0 0.0
    %636 = vmatpush1.msra.mxu0 0.0
    %637 = vmatprep.subr.mxu0 0.0
    %638 = vmatpush1.msra.mxu0 0.0
    %639 = vmatprep.subr.mxu0 0.0
    %640 = vmatpush1.msra.mxu0 0.0
    %641 = vmatprep.subr.mxu0 0.0
    %642 = vmatpush1.msra.mxu0 0.0
    %643 = vmatprep.subr.mxu0 0.0
    %644 = vmatpush1.msra.mxu0 0.0
    %645 = vmatprep.subr.mxu0 0.0
    %646 = vmatpush1.msra.mxu0 0.0
    %647 = vmatprep.subr.mxu0 0.0
    %648 = vmatpush1.msra.mxu0 0.0
    %649 = vmatprep.subr.mxu0 0.0
    %650 = vmatpush1.msra.mxu0 0.0
    %651 = vmatprep.subr.mxu0 0.0
    %652 = vmatpush1.msra.mxu0 0.0
    %653 = vmatprep.subr.mxu0 0.0
    %654 = vmatpush1.msra.mxu0 0.0
    %655 = vmatprep.subr.mxu0 0.0
    %656 = vmatpush1.msra.mxu0 0.0
    %657 = vmatprep.subr.mxu0 0.0
    %658 = vmatpush1.msra.mxu0 0.0
    %659 = vmatprep.subr.mxu0 0.0
    %660 = vmatpush1.msra.mxu0 0.0
    %661 = vmatprep.subr.mxu0 0.0
    %662 = vmatpush1.msra.mxu0 0.0
    %663 = vmatprep.mubr.f32.mxu0 0.0
    %664 = vmatmul.mubr.f32.gmra.mrb[0].mxu0 %v597
    %v665 = vpop.f32.mrb[0].mxu0
    %v666 = vadd.f32 %v593, %v665
    %v667 = vpop.f32.mrb[0].mxu0
    %668 = vdwg.mxu0
    %669 = vrot.lane.b32.xlu0 %v181, 112
    %v670 = vpop.permute.xlu0 %669
    %671 = vrot.lane.b32.xlu0 %v181, 80
    %v672 = vpop.permute.xlu0 %671
    %v673 = vsel %vm192, %v670, 0
    %v675 = vsel %vm192, %v672, 0
    %677 = vmatprep.subr.mxu0 0.0
    %678 = vmatpush1.xpose.msra.mxu0 %v675
    %679 = vmatprep.subr.mxu0 0.0
    %680 = vmatpush1.xpose.msra.mxu0 0.0
    %681 = vmatprep.subr.mxu0 0.0
    %682 = vmatpush1.xpose.msra.mxu0 0.0
    %683 = vmatprep.subr.mxu0 0.0
    %684 = vmatpush1.xpose.msra.mxu0 0.0
    %685 = vmatprep.subr.mxu0 0.0
    %686 = vmatpush1.xpose.msra.mxu0 0.0
    %687 = vmatprep.subr.mxu0 0.0
    %688 = vmatpush1.xpose.msra.mxu0 0.0
    %689 = vmatprep.subr.mxu0 0.0
    %690 = vmatpush1.xpose.msra.mxu0 0.0
    %691 = vmatprep.subr.mxu0 0.0
    %692 = vmatpush1.xpose.msra.mxu0 0.0
    %693 = vmatprep.subr.mxu0 0.0
    %694 = vmatpush1.xpose.msra.mxu0 0.0
    %695 = vmatprep.subr.mxu0 0.0
    %696 = vmatpush1.xpose.msra.mxu0 0.0
    %697 = vmatprep.subr.mxu0 0.0
    %698 = vmatpush1.xpose.msra.mxu0 0.0
    %699 = vmatprep.subr.mxu0 0.0
    %700 = vmatpush1.xpose.msra.mxu0 0.0
    %701 = vmatprep.subr.mxu0 0.0
    %702 = vmatpush1.xpose.msra.mxu0 0.0
    %703 = vmatprep.subr.mxu0 0.0
    %704 = vmatpush1.xpose.msra.mxu0 0.0
    %705 = vmatprep.subr.mxu0 0.0
    %706 = vmatpush1.xpose.msra.mxu0 0.0
    %707 = vmatprep.subr.mxu0 0.0
    %708 = vmatpush1.xpose.msra.mxu0 0.0
    %709 = vmatprep.subr.mxu0 0.0
    %710 = vmatpush1.xpose.msra.mxu0 0.0
    %711 = vmatprep.subr.mxu0 0.0
    %712 = vmatpush1.xpose.msra.mxu0 0.0
    %713 = vmatprep.subr.mxu0 0.0
    %714 = vmatpush1.xpose.msra.mxu0 0.0
    %715 = vmatprep.subr.mxu0 0.0
    %716 = vmatpush1.xpose.msra.mxu0 0.0
    %717 = vmatprep.subr.mxu0 0.0
    %718 = vmatpush1.xpose.msra.mxu0 0.0
    %719 = vmatprep.subr.mxu0 0.0
    %720 = vmatpush1.xpose.msra.mxu0 0.0
    %721 = vmatprep.subr.mxu0 0.0
    %722 = vmatpush1.xpose.msra.mxu0 0.0
    %723 = vmatprep.subr.mxu0 0.0
    %724 = vmatpush1.xpose.msra.mxu0 0.0
    %725 = vmatprep.subr.mxu0 0.0
    %726 = vmatpush1.xpose.msra.mxu0 0.0
    %727 = vmatprep.subr.mxu0 0.0
    %728 = vmatpush1.xpose.msra.mxu0 0.0
    %729 = vmatprep.subr.mxu0 0.0
    %730 = vmatpush1.xpose.msra.mxu0 0.0
    %731 = vmatprep.subr.mxu0 0.0
    %732 = vmatpush1.xpose.msra.mxu0 0.0
    %733 = vmatprep.subr.mxu0 0.0
    %734 = vmatpush1.xpose.msra.mxu0 0.0
    %735 = vmatprep.subr.mxu0 0.0
    %736 = vmatpush1.xpose.msra.mxu0 0.0
    %737 = vmatprep.subr.mxu0 0.0
    %738 = vmatpush1.xpose.msra.mxu0 0.0
    %739 = vmatprep.subr.mxu0 0.0
    %740 = vmatpush1.xpose.msra.mxu0 0.0
    %741 = vmatprep.mubr.f32.mxu0 0.0
    %742 = vmatmul.mubr.f32.gmra.mrb[0].mxu0 %v673
    %v743 = vpop.f32.mrb[0].mxu0
    %v744 = vadd.f32 0.0, %v743
    %v745 = vpop.f32.mrb[0].mxu0
    %746 = vdwg.mxu0
    %v747 = vmul.f32 %v744, 0.35355338
    %v748 = vsel %vm192, %v747, -inf
    %749 = vmax.xlane.f32.xlu0 %v748
    %v750 = vpop.xlane.xlu0 %749
    %v751 = vsub.f32 %v747, %v750
    %v752 = vmul.f32 %v751, 1.442695
    %v753 = vpow.pop %v752
    %v754 = vsel %vm192, %v753, 0.0
    %755 = vadd.xlane.f32.xlu0 %v754
    %v756 = vpop.xlane.xlu0 %755
    %v757 = vrcp.pop %v756
    %v758 = vmul.f32 %v753, %v757
    %759 = vrot.lane.b32.xlu0 %v181, 48
    %v760 = vpop.permute.xlu0 %759
    %v763 = vsel %vm192, %v758, 0
    %765 = vmatprep.subr.mxu0 0.0
    %766 = vmatpush1.msra.mxu0 %v760
    %767 = vmatprep.subr.mxu0 0.0
    %768 = vmatpush1.msra.mxu0 0.0
    %769 = vmatprep.subr.mxu0 0.0
    %770 = vmatpush1.msra.mxu0 0.0
    %771 = vmatprep.subr.mxu0 0.0
    %772 = vmatpush1.msra.mxu0 0.0
    %773 = vmatprep.subr.mxu0 0.0
    %774 = vmatpush1.msra.mxu0 0.0
    %775 = vmatprep.subr.mxu0 0.0
    %776 = vmatpush1.msra.mxu0 0.0
    %777 = vmatprep.subr.mxu0 0.0
    %778 = vmatpush1.msra.mxu0 0.0
    %779 = vmatprep.subr.mxu0 0.0
    %780 = vmatpush1.msra.mxu0 0.0
    %781 = vmatprep.subr.mxu0 0.0
    %782 = vmatpush1.msra.mxu0 0.0
    %783 = vmatprep.subr.mxu0 0.0
    %784 = vmatpush1.msra.mxu0 0.0
    %785 = vmatprep.subr.mxu0 0.0
    %786 = vmatpush1.msra.mxu0 0.0
    %787 = vmatprep.subr.mxu0 0.0
    %788 = vmatpush1.msra.mxu0 0.0
    %789 = vmatprep.subr.mxu0 0.0
    %790 = vmatpush1.msra.mxu0 0.0
    %791 = vmatprep.subr.mxu0 0.0
    %792 = vmatpush1.msra.mxu0 0.0
    %793 = vmatprep.subr.mxu0 0.0
    %794 = vmatpush1.msra.mxu0 0.0
    %795 = vmatprep.subr.mxu0 0.0
    %796 = vmatpush1.msra.mxu0 0.0
    %797 = vmatprep.subr.mxu0 0.0
    %798 = vmatpush1.msra.mxu0 0.0
    %799 = vmatprep.subr.mxu0 0.0
    %800 = vmatpush1.msra.mxu0 0.0
    %801 = vmatprep.subr.mxu0 0.0
    %802 = vmatpush1.msra.mxu0 0.0
    %803 = vmatprep.subr.mxu0 0.0
    %804 = vmatpush1.msra.mxu0 0.0
    %805 = vmatprep.subr.mxu0 0.0
    %806 = vmatpush1.msra.mxu0 0.0
    %807 = vmatprep.subr.mxu0 0.0
    %808 = vmatpush1.msra.mxu0 0.0
    %809 = vmatprep.subr.mxu0 0.0
    %810 = vmatpush1.msra.mxu0 0.0
    %811 = vmatprep.subr.mxu0 0.0
    %812 = vmatpush1.msra.mxu0 0.0
    %813 = vmatprep.subr.mxu0 0.0
    %814 = vmatpush1.msra.mxu0 0.0
    %815 = vmatprep.subr.mxu0 0.0
    %816 = vmatpush1.msra.mxu0 0.0
    %817 = vmatprep.subr.mxu0 0.0
    %818 = vmatpush1.msra.mxu0 0.0
    %819 = vmatprep.subr.mxu0 0.0
    %820 = vmatpush1.msra.mxu0 0.0
    %821 = vmatprep.subr.mxu0 0.0
    %822 = vmatpush1.msra.mxu0 0.0
    %823 = vmatprep.subr.mxu0 0.0
    %824 = vmatpush1.msra.mxu0 0.0
    %825 = vmatprep.subr.mxu0 0.0
    %826 = vmatpush1.msra.mxu0 0.0
    %827 = vmatprep.subr.mxu0 0.0
    %828 = vmatpush1.msra.mxu0 0.0
    %829 = vmatprep.mubr.f32.mxu0 0.0
    %830 = vmatmul.mubr.f32.gmra.mrb[0].mxu0 %v763
    %v831 = vpop.f32.mrb[0].mxu0
    %v832 = vadd.f32 0.0, %v831
    %v833 = vpop.f32.mrb[0].mxu0
    %834 = vdwg.mxu0
    %v835 = vld [vmem:[%s3 + $0x10] sm:$0xff]
    %v837 = vsel %vm192, %v832, 0
    %839 = vmatprep.subr.mxu0 0.0
    %840 = vmatpush1.msra.mxu0 %v835
    %841 = vmatprep.subr.mxu0 0.0
    %842 = vmatpush1.msra.mxu0 0.0
    %843 = vmatprep.subr.mxu0 0.0
    %844 = vmatpush1.msra.mxu0 0.0
    %845 = vmatprep.subr.mxu0 0.0
    %846 = vmatpush1.msra.mxu0 0.0
    %847 = vmatprep.subr.mxu0 0.0
    %848 = vmatpush1.msra.mxu0 0.0
    %849 = vmatprep.subr.mxu0 0.0
    %850 = vmatpush1.msra.mxu0 0.0
    %851 = vmatprep.subr.mxu0 0.0
    %852 = vmatpush1.msra.mxu0 0.0
    %853 = vmatprep.subr.mxu0 0.0
    %854 = vmatpush1.msra.mxu0 0.0
    %855 = vmatprep.subr.mxu0 0.0
    %856 = vmatpush1.msra.mxu0 0.0
    %857 = vmatprep.subr.mxu0 0.0
    %858 = vmatpush1.msra.mxu0 0.0
    %859 = vmatprep.subr.mxu0 0.0
    %860 = vmatpush1.msra.mxu0 0.0
    %861 = vmatprep.subr.mxu0 0.0
    %862 = vmatpush1.msra.mxu0 0.0
    %863 = vmatprep.subr.mxu0 0.0
    %864 = vmatpush1.msra.mxu0 0.0
    %865 = vmatprep.subr.mxu0 0.0
    %866 = vmatpush1.msra.mxu0 0.0
    %867 = vmatprep.subr.mxu0 0.0
    %868 = vmatpush1.msra.mxu0 0.0
    %869 = vmatprep.subr.mxu0 0.0
    %870 = vmatpush1.msra.mxu0 0.0
    %871 = vmatprep.subr.mxu0 0.0
    %872 = vmatpush1.msra.mxu0 0.0
    %873 = vmatprep.subr.mxu0 0.0
    %874 = vmatpush1.msra.mxu0 0.0
    %875 = vmatprep.subr.mxu0 0.0
    %876 = vmatpush1.msra.mxu0 0.0
    %877 = vmatprep.subr.mxu0 0.0
    %878 = vmatpush1.msra.mxu0 0.0
    %879 = vmatprep.subr.mxu0 0.0
    %880 = vmatpush1.msra.mxu0 0.0
    %881 = vmatprep.subr.mxu0 0.0
    %882 = vmatpush1.msra.mxu0 0.0
    %883 = vmatprep.subr.mxu0 0.0
    %884 = vmatpush1.msra.mxu0 0.0
    %885 = vmatprep.subr.mxu0 0.0
    %886 = vmatpush1.msra.mxu0 0.0
    %887 = vmatprep.subr.mxu0 0.0
    %888 = vmatpush1.msra.mxu0 0.0
    %889 = vmatprep.subr.mxu0 0.0
    %890 = vmatpush1.msra.mxu0 0.0
    %891 = vmatprep.subr.mxu0 0.0
    %892 = vmatpush1.msra.mxu0 0.0
    %893 = vmatprep.subr.mxu0 0.0
    %894 = vmatpush1.msra.mxu0 0.0
    %895 = vmatprep.subr.mxu0 0.0
    %896 = vmatpush1.msra.mxu0 0.0
    %897 = vmatprep.subr.mxu0 0.0
    %898 = vmatpush1.msra.mxu0 0.0
    %899 = vmatprep.subr.mxu0 0.0
    %900 = vmatpush1.msra.mxu0 0.0
    %901 = vmatprep.subr.mxu0 0.0
    %902 = vmatpush1.msra.mxu0 0.0
    %903 = vmatprep.mubr.f32.mxu0 0.0
    %904 = vmatmul.mubr.f32.gmra.mrb[0].mxu0 %v837
    %v905 = vpop.f32.mrb[0].mxu0
    %v906 = vadd.f32 0.0, %v905
    %v907 = vpop.f32.mrb[0].mxu0
    %908 = vdwg.mxu0
    %v909 = vadd.f32 %v666, %v906
    %910 = vrot.lane.b32.xlu0 %v181, 104
    %v911 = vpop.permute.xlu0 %910
    %912 = vrot.lane.b32.xlu0 %v181, 72
    %v913 = vpop.permute.xlu0 %912
    %v914 = vsel %vm192, %v911, 0
    %v916 = vsel %vm192, %v913, 0
    %918 = vmatprep.subr.mxu0 0.0
    %919 = vmatpush1.xpose.msra.mxu0 %v916
    %920 = vmatprep.subr.mxu0 0.0
    %921 = vmatpush1.xpose.msra.mxu0 0.0
    %922 = vmatprep.subr.mxu0 0.0
    %923 = vmatpush1.xpose.msra.mxu0 0.0
    %924 = vmatprep.subr.mxu0 0.0
    %925 = vmatpush1.xpose.msra.mxu0 0.0
    %926 = vmatprep.subr.mxu0 0.0
    %927 = vmatpush1.xpose.msra.mxu0 0.0
    %928 = vmatprep.subr.mxu0 0.0
    %929 = vmatpush1.xpose.msra.mxu0 0.0
    %930 = vmatprep.subr.mxu0 0.0
    %931 = vmatpush1.xpose.msra.mxu0 0.0
    %932 = vmatprep.subr.mxu0 0.0
    %933 = vmatpush1.xpose.msra.mxu0 0.0
    %934 = vmatprep.subr.mxu0 0.0
    %935 = vmatpush1.xpose.msra.mxu0 0.0
    %936 = vmatprep.subr.mxu0 0.0
    %937 = vmatpush1.xpose.msra.mxu0 0.0
    %938 = vmatprep.subr.mxu0 0.0
    %939 = vmatpush1.xpose.msra.mxu0 0.0
    %940 = vmatprep.subr.mxu0 0.0
    %941 = vmatpush1.xpose.msra.mxu0 0.0
    %942 = vmatprep.subr.mxu0 0.0
    %943 = vmatpush1.xpose.msra.mxu0 0.0
    %944 = vmatprep.subr.mxu0 0.0
    %945 = vmatpush1.xpose.msra.mxu0 0.0
    %946 = vmatprep.subr.mxu0 0.0
    %947 = vmatpush1.xpose.msra.mxu0 0.0
    %948 = vmatprep.subr.mxu0 0.0
    %949 = vmatpush1.xpose.msra.mxu0 0.0
    %950 = vmatprep.subr.mxu0 0.0
    %951 = vmatpush1.xpose.msra.mxu0 0.0
    %952 = vmatprep.subr.mxu0 0.0
    %953 = vmatpush1.xpose.msra.mxu0 0.0
    %954 = vmatprep.subr.mxu0 0.0
    %955 = vmatpush1.xpose.msra.mxu0 0.0
    %956 = vmatprep.subr.mxu0 0.0
    %957 = vmatpush1.xpose.msra.mxu0 0.0
    %958 = vmatprep.subr.mxu0 0.0
    %959 = vmatpush1.xpose.msra.mxu0 0.0
    %960 = vmatprep.subr.mxu0 0.0
    %961 = vmatpush1.xpose.msra.mxu0 0.0
    %962 = vmatprep.subr.mxu0 0.0
    %963 = vmatpush1.xpose.msra.mxu0 0.0
    %964 = vmatprep.subr.mxu0 0.0
    %965 = vmatpush1.xpose.msra.mxu0 0.0
    %966 = vmatprep.subr.mxu0 0.0
    %967 = vmatpush1.xpose.msra.mxu0 0.0
    %968 = vmatprep.subr.mxu0 0.0
    %969 = vmatpush1.xpose.msra.mxu0 0.0
    %970 = vmatprep.subr.mxu0 0.0
    %971 = vmatpush1.xpose.msra.mxu0 0.0
    %972 = vmatprep.subr.mxu0 0.0
    %973 = vmatpush1.xpose.msra.mxu0 0.0
    %974 = vmatprep.subr.mxu0 0.0
    %975 = vmatpush1.xpose.msra.mxu0 0.0
    %976 = vmatprep.subr.mxu0 0.0
    %977 = vmatpush1.xpose.msra.mxu0 0.0
    %978 = vmatprep.subr.mxu0 0.0
    %979 = vmatpush1.xpose.msra.mxu0 0.0
    %980 = vmatprep.subr.mxu0 0.0
    %981 = vmatpush1.xpose.msra.mxu0 0.0
    %982 = vmatprep.mubr.f32.mxu0 0.0
    %983 = vmatmul.mubr.f32.gmra.mrb[0].mxu0 %v914
    %v984 = vpop.f32.mrb[0].mxu0
    %v985 = vadd.f32 0.0, %v984
    %v986 = vpop.f32.mrb[0].mxu0
    %987 = vdwg.mxu0
    %v988 = vmul.f32 %v985, 0.35355338
    %v989 = vsel %vm192, %v988, -inf
    %990 = vmax.xlane.f32.xlu0 %v989
    %v991 = vpop.xlane.xlu0 %990
    %v992 = vsub.f32 %v988, %v991
    %v993 = vmul.f32 %v992, 1.442695
    %v994 = vpow.pop %v993
    %v995 = vsel %vm192, %v994, 0.0
    %996 = vadd.xlane.f32.xlu0 %v995
    %v997 = vpop.xlane.xlu0 %996
    %v998 = vrcp.pop %v997
    %v999 = vmul.f32 %v994, %v998
    %1000 = vrot.lane.b32.xlu0 %v181, 40
    %v1001 = vpop.permute.xlu0 %1000
    %v1004 = vsel %vm192, %v999, 0
    %1006 = vmatprep.subr.mxu0 0.0
    %1007 = vmatpush1.msra.mxu0 %v1001
    %1008 = vmatprep.subr.mxu0 0.0
    %1009 = vmatpush1.msra.mxu0 0.0
    %1010 = vmatprep.subr.mxu0 0.0
    %1011 = vmatpush1.msra.mxu0 0.0
    %1012 = vmatprep.subr.mxu0 0.0
    %1013 = vmatpush1.msra.mxu0 0.0
    %1014 = vmatprep.subr.mxu0 0.0
    %1015 = vmatpush1.msra.mxu0 0.0
    %1016 = vmatprep.subr.mxu0 0.0
    %1017 = vmatpush1.msra.mxu0 0.0
    %1018 = vmatprep.subr.mxu0 0.0
    %1019 = vmatpush1.msra.mxu0 0.0
    %1020 = vmatprep.subr.mxu0 0.0
    %1021 = vmatpush1.msra.mxu0 0.0
    %1022 = vmatprep.subr.mxu0 0.0
    %1023 = vmatpush1.msra.mxu0 0.0
    %1024 = vmatprep.subr.mxu0 0.0
    %1025 = vmatpush1.msra.mxu0 0.0
    %1026 = vmatprep.subr.mxu0 0.0
    %1027 = vmatpush1.msra.mxu0 0.0
    %1028 = vmatprep.subr.mxu0 0.0
    %1029 = vmatpush1.msra.mxu0 0.0
    %1030 = vmatprep.subr.mxu0 0.0
    %1031 = vmatpush1.msra.mxu0 0.0
    %1032 = vmatprep.subr.mxu0 0.0
    %1033 = vmatpush1.msra.mxu0 0.0
    %1034 = vmatprep.subr.mxu0 0.0
    %1035 = vmatpush1.msra.mxu0 0.0
    %1036 = vmatprep.subr.mxu0 0.0
    %1037 = vmatpush1.msra.mxu0 0.0
    %1038 = vmatprep.subr.mxu0 0.0
    %1039 = vmatpush1.msra.mxu0 0.0
    %1040 = vmatprep.subr.mxu0 0.0
    %1041 = vmatpush1.msra.mxu0 0.0
    %1042 = vmatprep.subr.mxu0 0.0
    %1043 = vmatpush1.msra.mxu0 0.0
    %1044 = vmatprep.subr.mxu0 0.0
    %1045 = vmatpush1.msra.mxu0 0.0
    %1046 = vmatprep.subr.mxu0 0.0
    %1047 = vmatpush1.msra.mxu0 0.0
    %1048 = vmatprep.subr.mxu0 0.0
    %1049 = vmatpush1.msra.mxu0 0.0
    %1050 = vmatprep.subr.mxu0 0.0
    %1051 = vmatpush1.msra.mxu0 0.0
    %1052 = vmatprep.subr.mxu0 0.0
    %1053 = vmatpush1.msra.mxu0 0.0
    %1054 = vmatprep.subr.mxu0 0.0
    %1055 = vmatpush1.msra.mxu0 0.0
    %1056 = vmatprep.subr.mxu0 0.0
    %1057 = vmatpush1.msra.mxu0 0.0
    %1058 = vmatprep.subr.mxu0 0.0
    %1059 = vmatpush1.msra.mxu0 0.0
    %1060 = vmatprep.subr.mxu0 0.0
    %1061 = vmatpush1.msra.mxu0 0.0
    %1062 = vmatprep.subr.mxu0 0.0
    %1063 = vmatpush1.msra.mxu0 0.0
    %1064 = vmatprep.subr.mxu0 0.0
    %1065 = vmatpush1.msra.mxu0 0.0
    %1066 = vmatprep.subr.mxu0 0.0
    %1067 = vmatpush1.msra.mxu0 0.0
    %1068 = vmatprep.subr.mxu0 0.0
    %1069 = vmatpush1.msra.mxu0 0.0
    %1070 = vmatprep.mubr.f32.mxu0 0.0
    %1071 = vmatmul.mubr.f32.gmra.mrb[0].mxu0 %v1004
    %v1072 = vpop.f32.mrb[0].mxu0
    %v1073 = vadd.f32 0.0, %v1072
    %v1074 = vpop.f32.mrb[0].mxu0
    %1075 = vdwg.mxu0
    %v1076 = vld [vmem:[%s3 + $0x18] sm:$0xff]
    %v1078 = vsel %vm192, %v1073, 0
    %1080 = vmatprep.subr.mxu0 0.0
    %1081 = vmatpush1.msra.mxu0 %v1076
    %1082 = vmatprep.subr.mxu0 0.0
    %1083 = vmatpush1.msra.mxu0 0.0
    %1084 = vmatprep.subr.mxu0 0.0
    %1085 = vmatpush1.msra.mxu0 0.0
    %1086 = vmatprep.subr.mxu0 0.0
    %1087 = vmatpush1.msra.mxu0 0.0
    %1088 = vmatprep.subr.mxu0 0.0
    %1089 = vmatpush1.msra.mxu0 0.0
    %1090 = vmatprep.subr.mxu0 0.0
    %1091 = vmatpush1.msra.mxu0 0.0
    %1092 = vmatprep.subr.mxu0 0.0
    %1093 = vmatpush1.msra.mxu0 0.0
    %1094 = vmatprep.subr.mxu0 0.0
    %1095 = vmatpush1.msra.mxu0 0.0
    %1096 = vmatprep.subr.mxu0 0.0
    %1097 = vmatpush1.msra.mxu0 0.0
    %1098 = vmatprep.subr.mxu0 0.0
    %1099 = vmatpush1.msra.mxu0 0.0
    %1100 = vmatprep.subr.mxu0 0.0
    %1101 = vmatpush1.msra.mxu0 0.0
    %1102 = vmatprep.subr.mxu0 0.0
    %1103 = vmatpush1.msra.mxu0 0.0
    %1104 = vmatprep.subr.mxu0 0.0
    %1105 = vmatpush1.msra.mxu0 0.0
    %1106 = vmatprep.subr.mxu0 0.0
    %1107 = vmatpush1.msra.mxu0 0.0
    %1108 = vmatprep.subr.mxu0 0.0
    %1109 = vmatpush1.msra.mxu0 0.0
    %1110 = vmatprep.subr.mxu0 0.0
    %1111 = vmatpush1.msra.mxu0 0.0
    %1112 = vmatprep.subr.mxu0 0.0
    %1113 = vmatpush1.msra.mxu0 0.0
    %1114 = vmatprep.subr.mxu0 0.0
    %1115 = vmatpush1.msra.mxu0 0.0
    %1116 = vmatprep.subr.mxu0 0.0
    %1117 = vmatpush1.msra.mxu0 0.0
    %1118 = vmatprep.subr.mxu0 0.0
    %1119 = vmatpush1.msra.mxu0 0.0
    %1120 = vmatprep.subr.mxu0 0.0
    %1121 = vmatpush1.msra.mxu0 0.0
    %1122 = vmatprep.subr.mxu0 0.0
    %1123 = vmatpush1.msra.mxu0 0.0
    %1124 = vmatprep.subr.mxu0 0.0
    %1125 = vmatpush1.msra.mxu0 0.0
    %1126 = vmatprep.subr.mxu0 0.0
    %1127 = vmatpush1.msra.mxu0 0.0
    %1128 = vmatprep.subr.mxu0 0.0
    %1129 = vmatpush1.msra.mxu0 0.0
    %1130 = vmatprep.subr.mxu0 0.0
    %1131 = vmatpush1.msra.mxu0 0.0
    %1132 = vmatprep.subr.mxu0 0.0
    %1133 = vmatpush1.msra.mxu0 0.0
    %1134 = vmatprep.subr.mxu0 0.0
    %1135 = vmatpush1.msra.mxu0 0.0
    %1136 = vmatprep.subr.mxu0 0.0
    %1137 = vmatpush1.msra.mxu0 0.0
    %1138 = vmatprep.subr.mxu0 0.0
    %1139 = vmatpush1.msra.mxu0 0.0
    %1140 = vmatprep.subr.mxu0 0.0
    %1141 = vmatpush1.msra.mxu0 0.0
    %1142 = vmatprep.subr.mxu0 0.0
    %1143 = vmatpush1.msra.mxu0 0.0
    %1144 = vmatprep.mubr.f32.mxu0 0.0
    %1145 = vmatmul.mubr.f32.gmra.mrb[0].mxu0 %v1078
    %v1146 = vpop.f32.mrb[0].mxu0
    %v1147 = vadd.f32 0.0, %v1146
    %v1148 = vpop.f32.mrb[0].mxu0
    %1149 = vdwg.mxu0
    %v1150 = vadd.f32 %v909, %v1147
    %1152 = vrot.lane.b32.xlu0 %v186, 96
    %v1153 = vpop.permute.xlu0 %1152
    %v1154 = vsel %vm192, %v186, 0
    %v1156 = vsel %vm192, %v1153, 0
    %1158 = vmatprep.subr.mxu0 0.0
    %1159 = vmatpush1.xpose.msra.mxu0 %v1156
    %1160 = vmatprep.subr.mxu0 0.0
    %1161 = vmatpush1.xpose.msra.mxu0 0.0
    %1162 = vmatprep.subr.mxu0 0.0
    %1163 = vmatpush1.xpose.msra.mxu0 0.0
    %1164 = vmatprep.subr.mxu0 0.0
    %1165 = vmatpush1.xpose.msra.mxu0 0.0
    %1166 = vmatprep.subr.mxu0 0.0
    %1167 = vmatpush1.xpose.msra.mxu0 0.0
    %1168 = vmatprep.subr.mxu0 0.0
    %1169 = vmatpush1.xpose.msra.mxu0 0.0
    %1170 = vmatprep.subr.mxu0 0.0
    %1171 = vmatpush1.xpose.msra.mxu0 0.0
    %1172 = vmatprep.subr.mxu0 0.0
    %1173 = vmatpush1.xpose.msra.mxu0 0.0
    %1174 = vmatprep.subr.mxu0 0.0
    %1175 = vmatpush1.xpose.msra.mxu0 0.0
    %1176 = vmatprep.subr.mxu0 0.0
    %1177 = vmatpush1.xpose.msra.mxu0 0.0
    %1178 = vmatprep.subr.mxu0 0.0
    %1179 = vmatpush1.xpose.msra.mxu0 0.0
    %1180 = vmatprep.subr.mxu0 0.0
    %1181 = vmatpush1.xpose.msra.mxu0 0.0
    %1182 = vmatprep.subr.mxu0 0.0
    %1183 = vmatpush1.xpose.msra.mxu0 0.0
    %1184 = vmatprep.subr.mxu0 0.0
    %1185 = vmatpush1.xpose.msra.mxu0 0.0
    %1186 = vmatprep.subr.mxu0 0.0
    %1187 = vmatpush1.xpose.msra.mxu0 0.0
    %1188 = vmatprep.subr.mxu0 0.0
    %1189 = vmatpush1.xpose.msra.mxu0 0.0
    %1190 = vmatprep.subr.mxu0 0.0
    %1191 = vmatpush1.xpose.msra.mxu0 0.0
    %1192 = vmatprep.subr.mxu0 0.0
    %1193 = vmatpush1.xpose.msra.mxu0 0.0
    %1194 = vmatprep.subr.mxu0 0.0
    %1195 = vmatpush1.xpose.msra.mxu0 0.0
    %1196 = vmatprep.subr.mxu0 0.0
    %1197 = vmatpush1.xpose.msra.mxu0 0.0
    %1198 = vmatprep.subr.mxu0 0.0
    %1199 = vmatpush1.xpose.msra.mxu0 0.0
    %1200 = vmatprep.subr.mxu0 0.0
    %1201 = vmatpush1.xpose.msra.mxu0 0.0
    %1202 = vmatprep.subr.mxu0 0.0
    %1203 = vmatpush1.xpose.msra.mxu0 0.0
    %1204 = vmatprep.subr.mxu0 0.0
    %1205 = vmatpush1.xpose.msra.mxu0 0.0
    %1206 = vmatprep.subr.mxu0 0.0
    %1207 = vmatpush1.xpose.msra.mxu0 0.0
    %1208 = vmatprep.subr.mxu0 0.0
    %1209 = vmatpush1.xpose.msra.mxu0 0.0
    %1210 = vmatprep.subr.mxu0 0.0
    %1211 = vmatpush1.xpose.msra.mxu0 0.0
    %1212 = vmatprep.subr.mxu0 0.0
    %1213 = vmatpush1.xpose.msra.mxu0 0.0
    %1214 = vmatprep.subr.mxu0 0.0
    %1215 = vmatpush1.xpose.msra.mxu0 0.0
    %1216 = vmatprep.subr.mxu0 0.0
    %1217 = vmatpush1.xpose.msra.mxu0 0.0
    %1218 = vmatprep.subr.mxu0 0.0
    %1219 = vmatpush1.xpose.msra.mxu0 0.0
    %1220 = vmatprep.subr.mxu0 0.0
    %1221 = vmatpush1.xpose.msra.mxu0 0.0
    %1222 = vmatprep.mubr.f32.mxu0 0.0
    %1223 = vmatmul.mubr.f32.gmra.mrb[0].mxu0 %v1154
    %v1224 = vpop.f32.mrb[0].mxu0
    %v1225 = vadd.f32 0.0, %v1224
    %v1226 = vpop.f32.mrb[0].mxu0
    %1227 = vdwg.mxu0
    %v1228 = vmul.f32 %v1225, 0.35355338
    %v1229 = vsel %vm192, %v1228, -inf
    %1230 = vmax.xlane.f32.xlu0 %v1229
    %v1231 = vpop.xlane.xlu0 %1230
    %v1232 = vsub.f32 %v1228, %v1231
    %v1233 = vmul.f32 %v1232, 1.442695
    %v1234 = vpow.pop %v1233
    %v1235 = vsel %vm192, %v1234, 0.0
    %1236 = vadd.xlane.f32.xlu0 %v1235
    %v1237 = vpop.xlane.xlu0 %1236
    %v1238 = vrcp.pop %v1237
    %v1239 = vmul.f32 %v1234, %v1238
    %1240 = vrot.lane.b32.xlu0 %v186, 64
    %v1241 = vpop.permute.xlu0 %1240
    %v1244 = vsel %vm192, %v1239, 0
    %1246 = vmatprep.subr.mxu0 0.0
    %1247 = vmatpush1.msra.mxu0 %v1241
    %1248 = vmatprep.subr.mxu0 0.0
    %1249 = vmatpush1.msra.mxu0 0.0
    %1250 = vmatprep.subr.mxu0 0.0
    %1251 = vmatpush1.msra.mxu0 0.0
    %1252 = vmatprep.subr.mxu0 0.0
    %1253 = vmatpush1.msra.mxu0 0.0
    %1254 = vmatprep.subr.mxu0 0.0
    %1255 = vmatpush1.msra.mxu0 0.0
    %1256 = vmatprep.subr.mxu0 0.0
    %1257 = vmatpush1.msra.mxu0 0.0
    %1258 = vmatprep.subr.mxu0 0.0
    %1259 = vmatpush1.msra.mxu0 0.0
    %1260 = vmatprep.subr.mxu0 0.0
    %1261 = vmatpush1.msra.mxu0 0.0
    %1262 = vmatprep.subr.mxu0 0.0
    %1263 = vmatpush1.msra.mxu0 0.0
    %1264 = vmatprep.subr.mxu0 0.0
    %1265 = vmatpush1.msra.mxu0 0.0
    %1266 = vmatprep.subr.mxu0 0.0
    %1267 = vmatpush1.msra.mxu0 0.0
    %1268 = vmatprep.subr.mxu0 0.0
    %1269 = vmatpush1.msra.mxu0 0.0
    %1270 = vmatprep.subr.mxu0 0.0
    %1271 = vmatpush1.msra.mxu0 0.0
    %1272 = vmatprep.subr.mxu0 0.0
    %1273 = vmatpush1.msra.mxu0 0.0
    %1274 = vmatprep.subr.mxu0 0.0
    %1275 = vmatpush1.msra.mxu0 0.0
    %1276 = vmatprep.subr.mxu0 0.0
    %1277 = vmatpush1.msra.mxu0 0.0
    %1278 = vmatprep.subr.mxu0 0.0
    %1279 = vmatpush1.msra.mxu0 0.0
    %1280 = vmatprep.subr.mxu0 0.0
    %1281 = vmatpush1.msra.mxu0 0.0
    %1282 = vmatprep.subr.mxu0 0.0
    %1283 = vmatpush1.msra.mxu0 0.0
    %1284 = vmatprep.subr.mxu0 0.0
    %1285 = vmatpush1.msra.mxu0 0.0
    %1286 = vmatprep.subr.mxu0 0.0
    %1287 = vmatpush1.msra.mxu0 0.0
    %1288 = vmatprep.subr.mxu0 0.0
    %1289 = vmatpush1.msra.mxu0 0.0
    %1290 = vmatprep.subr.mxu0 0.0
    %1291 = vmatpush1.msra.mxu0 0.0
    %1292 = vmatprep.subr.mxu0 0.0
    %1293 = vmatpush1.msra.mxu0 0.0
    %1294 = vmatprep.subr.mxu0 0.0
    %1295 = vmatpush1.msra.mxu0 0.0
    %1296 = vmatprep.subr.mxu0 0.0
    %1297 = vmatpush1.msra.mxu0 0.0
    %1298 = vmatprep.subr.mxu0 0.0
    %1299 = vmatpush1.msra.mxu0 0.0
    %1300 = vmatprep.subr.mxu0 0.0
    %1301 = vmatpush1.msra.mxu0 0.0
    %1302 = vmatprep.subr.mxu0 0.0
    %1303 = vmatpush1.msra.mxu0 0.0
    %1304 = vmatprep.subr.mxu0 0.0
    %1305 = vmatpush1.msra.mxu0 0.0
    %1306 = vmatprep.subr.mxu0 0.0
    %1307 = vmatpush1.msra.mxu0 0.0
    %1308 = vmatprep.subr.mxu0 0.0
    %1309 = vmatpush1.msra.mxu0 0.0
    %1310 = vmatprep.mubr.f32.mxu0 0.0
    %1311 = vmatmul.mubr.f32.gmra.mrb[0].mxu0 %v1244
    %v1312 = vpop.f32.mrb[0].mxu0
    %v1313 = vadd.f32 0.0, %v1312
    %v1314 = vpop.f32.mrb[0].mxu0
    %1315 = vdwg.mxu0
    %1316 = vrot.lane.b32.xlu0 %v186, 120
    %v1317 = vpop.permute.xlu0 %1316
    %1318 = vrot.lane.b32.xlu0 %v186, 88
    %v1319 = vpop.permute.xlu0 %1318
    %v1320 = vsel %vm192, %v1317, 0
    %v1322 = vsel %vm192, %v1319, 0
    %1324 = vmatprep.subr.mxu0 0.0
    %1325 = vmatpush1.xpose.msra.mxu0 %v1322
    %1326 = vmatprep.subr.mxu0 0.0
    %1327 = vmatpush1.xpose.msra.mxu0 0.0
    %1328 = vmatprep.subr.mxu0 0.0
    %1329 = vmatpush1.xpose.msra.mxu0 0.0
    %1330 = vmatprep.subr.mxu0 0.0
    %1331 = vmatpush1.xpose.msra.mxu0 0.0
    %1332 = vmatprep.subr.mxu0 0.0
    %1333 = vmatpush1.xpose.msra.mxu0 0.0
    %1334 = vmatprep.subr.mxu0 0.0
    %1335 = vmatpush1.xpose.msra.mxu0 0.0
    %1336 = vmatprep.subr.mxu0 0.0
    %1337 = vmatpush1.xpose.msra.mxu0 0.0
    %1338 = vmatprep.subr.mxu0 0.0
    %1339 = vmatpush1.xpose.msra.mxu0 0.0
    %1340 = vmatprep.subr.mxu0 0.0
    %1341 = vmatpush1.xpose.msra.mxu0 0.0
    %1342 = vmatprep.subr.mxu0 0.0
    %1343 = vmatpush1.xpose.msra.mxu0 0.0
    %1344 = vmatprep.subr.mxu0 0.0
    %1345 = vmatpush1.xpose.msra.mxu0 0.0
    %1346 = vmatprep.subr.mxu0 0.0
    %1347 = vmatpush1.xpose.msra.mxu0 0.0
    %1348 = vmatprep.subr.mxu0 0.0
    %1349 = vmatpush1.xpose.msra.mxu0 0.0
    %1350 = vmatprep.subr.mxu0 0.0
    %1351 = vmatpush1.xpose.msra.mxu0 0.0
    %1352 = vmatprep.subr.mxu0 0.0
    %1353 = vmatpush1.xpose.msra.mxu0 0.0
    %1354 = vmatprep.subr.mxu0 0.0
    %1355 = vmatpush1.xpose.msra.mxu0 0.0
    %1356 = vmatprep.subr.mxu0 0.0
    %1357 = vmatpush1.xpose.msra.mxu0 0.0
    %1358 = vmatprep.subr.mxu0 0.0
    %1359 = vmatpush1.xpose.msra.mxu0 0.0
    %1360 = vmatprep.subr.mxu0 0.0
    %1361 = vmatpush1.xpose.msra.mxu0 0.0
    %1362 = vmatprep.subr.mxu0 0.0
    %1363 = vmatpush1.xpose.msra.mxu0 0.0
    %1364 = vmatprep.subr.mxu0 0.0
    %1365 = vmatpush1.xpose.msra.mxu0 0.0
    %1366 = vmatprep.subr.mxu0 0.0
    %1367 = vmatpush1.xpose.msra.mxu0 0.0
    %1368 = vmatprep.subr.mxu0 0.0
    %1369 = vmatpush1.xpose.msra.mxu0 0.0
    %1370 = vmatprep.subr.mxu0 0.0
    %1371 = vmatpush1.xpose.msra.mxu0 0.0
    %1372 = vmatprep.subr.mxu0 0.0
    %1373 = vmatpush1.xpose.msra.mxu0 0.0
    %1374 = vmatprep.subr.mxu0 0.0
    %1375 = vmatpush1.xpose.msra.mxu0 0.0
    %1376 = vmatprep.subr.mxu0 0.0
    %1377 = vmatpush1.xpose.msra.mxu0 0.0
    %1378 = vmatprep.subr.mxu0 0.0
    %1379 = vmatpush1.xpose.msra.mxu0 0.0
    %1380 = vmatprep.subr.mxu0 0.0
    %1381 = vmatpush1.xpose.msra.mxu0 0.0
    %1382 = vmatprep.subr.mxu0 0.0
    %1383 = vmatpush1.xpose.msra.mxu0 0.0
    %1384 = vmatprep.subr.mxu0 0.0
    %1385 = vmatpush1.xpose.msra.mxu0 0.0
    %1386 = vmatprep.subr.mxu0 0.0
    %1387 = vmatpush1.xpose.msra.mxu0 0.0
    %1388 = vmatprep.mubr.f32.mxu0 0.0
    %1389 = vmatmul.mubr.f32.gmra.mrb[0].mxu0 %v1320
    %v1390 = vpop.f32.mrb[0].mxu0
    %v1391 = vadd.f32 0.0, %v1390
    %v1392 = vpop.f32.mrb[0].mxu0
    %1393 = vdwg.mxu0
    %v1394 = vmul.f32 %v1391, 0.35355338
    %v1395 = vsel %vm192, %v1394, -inf
    %1396 = vmax.xlane.f32.xlu0 %v1395
    %v1397 = vpop.xlane.xlu0 %1396
    %v1398 = vsub.f32 %v1394, %v1397
    %v1399 = vmul.f32 %v1398, 1.442695
    %v1400 = vpow.pop %v1399
    %v1401 = vsel %vm192, %v1400, 0.0
    %1402 = vadd.xlane.f32.xlu0 %v1401
    %v1403 = vpop.xlane.xlu0 %1402
    %v1404 = vrcp.pop %v1403
    %v1405 = vmul.f32 %v1400, %v1404
    %1406 = vrot.lane.b32.xlu0 %v186, 56
    %v1407 = vpop.permute.xlu0 %1406
    %v1410 = vsel %vm192, %v1405, 0
    %1412 = vmatprep.subr.mxu0 0.0
    %1413 = vmatpush1.msra.mxu0 %v1407
    %1414 = vmatprep.subr.mxu0 0.0
    %1415 = vmatpush1.msra.mxu0 0.0
    %1416 = vmatprep.subr.mxu0 0.0
    %1417 = vmatpush1.msra.mxu0 0.0
    %1418 = vmatprep.subr.mxu0 0.0
    %1419 = vmatpush1.msra.mxu0 0.0
    %1420 = vmatprep.subr.mxu0 0.0
    %1421 = vmatpush1.msra.mxu0 0.0
    %1422 = vmatprep.subr.mxu0 0.0
    %1423 = vmatpush1.msra.mxu0 0.0
    %1424 = vmatprep.subr.mxu0 0.0
    %1425 = vmatpush1.msra.mxu0 0.0
    %1426 = vmatprep.subr.mxu0 0.0
    %1427 = vmatpush1.msra.mxu0 0.0
    %1428 = vmatprep.subr.mxu0 0.0
    %1429 = vmatpush1.msra.mxu0 0.0
    %1430 = vmatprep.subr.mxu0 0.0
    %1431 = vmatpush1.msra.mxu0 0.0
    %1432 = vmatprep.subr.mxu0 0.0
    %1433 = vmatpush1.msra.mxu0 0.0
    %1434 = vmatprep.subr.mxu0 0.0
    %1435 = vmatpush1.msra.mxu0 0.0
    %1436 = vmatprep.subr.mxu0 0.0
    %1437 = vmatpush1.msra.mxu0 0.0
    %1438 = vmatprep.subr.mxu0 0.0
    %1439 = vmatpush1.msra.mxu0 0.0
    %1440 = vmatprep.subr.mxu0 0.0
    %1441 = vmatpush1.msra.mxu0 0.0
    %1442 = vmatprep.subr.mxu0 0.0
    %1443 = vmatpush1.msra.mxu0 0.0
    %1444 = vmatprep.subr.mxu0 0.0
    %1445 = vmatpush1.msra.mxu0 0.0
    %1446 = vmatprep.subr.mxu0 0.0
    %1447 = vmatpush1.msra.mxu0 0.0
    %1448 = vmatprep.subr.mxu0 0.0
    %1449 = vmatpush1.msra.mxu0 0.0
    %1450 = vmatprep.subr.mxu0 0.0
    %1451 = vmatpush1.msra.mxu0 0.0
    %1452 = vmatprep.subr.mxu0 0.0
    %1453 = vmatpush1.msra.mxu0 0.0
    %1454 = vmatprep.subr.mxu0 0.0
    %1455 = vmatpush1.msra.mxu0 0.0
    %1456 = vmatprep.subr.mxu0 0.0
    %1457 = vmatpush1.msra.mxu0 0.0
    %1458 = vmatprep.subr.mxu0 0.0
    %1459 = vmatpush1.msra.mxu0 0.0
    %1460 = vmatprep.subr.mxu0 0.0
    %1461 = vmatpush1.msra.mxu0 0.0
    %1462 = vmatprep.subr.mxu0 0.0
    %1463 = vmatpush1.msra.mxu0 0.0
    %1464 = vmatprep.subr.mxu0 0.0
    %1465 = vmatpush1.msra.mxu0 0.0
    %1466 = vmatprep.subr.mxu0 0.0
    %1467 = vmatpush1.msra.mxu0 0.0
    %1468 = vmatprep.subr.mxu0 0.0
    %1469 = vmatpush1.msra.mxu0 0.0
    %1470 = vmatprep.subr.mxu0 0.0
    %1471 = vmatpush1.msra.mxu0 0.0
    %1472 = vmatprep.subr.mxu0 0.0
    %1473 = vmatpush1.msra.mxu0 0.0
    %1474 = vmatprep.subr.mxu0 0.0
    %1475 = vmatpush1.msra.mxu0 0.0
    %1476 = vmatprep.mubr.f32.mxu0 0.0
    %1477 = vmatmul.mubr.f32.gmra.mrb[0].mxu0 %v1410
    %v1478 = vpop.f32.mrb[0].mxu0
    %v1479 = vadd.f32 0.0, %v1478
    %v1480 = vpop.f32.mrb[0].mxu0
    %1481 = vdwg.mxu0
    %v1483 = vsel %vm192, %v1479, 0
    %1485 = vmatprep.subr.mxu0 0.0
    %1486 = vmatpush1.msra.mxu0 %v522
    %1487 = vmatprep.subr.mxu0 0.0
    %1488 = vmatpush1.msra.mxu0 0.0
    %1489 = vmatprep.subr.mxu0 0.0
    %1490 = vmatpush1.msra.mxu0 0.0
    %1491 = vmatprep.subr.mxu0 0.0
    %1492 = vmatpush1.msra.mxu0 0.0
    %1493 = vmatprep.subr.mxu0 0.0
    %1494 = vmatpush1.msra.mxu0 0.0
    %1495 = vmatprep.subr.mxu0 0.0
    %1496 = vmatpush1.msra.mxu0 0.0
    %1497 = vmatprep.subr.mxu0 0.0
    %1498 = vmatpush1.msra.mxu0 0.0
    %1499 = vmatprep.subr.mxu0 0.0
    %1500 = vmatpush1.msra.mxu0 0.0
    %1501 = vmatprep.subr.mxu0 0.0
    %1502 = vmatpush1.msra.mxu0 0.0
    %1503 = vmatprep.subr.mxu0 0.0
    %1504 = vmatpush1.msra.mxu0 0.0
    %1505 = vmatprep.subr.mxu0 0.0
    %1506 = vmatpush1.msra.mxu0 0.0
    %1507 = vmatprep.subr.mxu0 0.0
    %1508 = vmatpush1.msra.mxu0 0.0
    %1509 = vmatprep.subr.mxu0 0.0
    %1510 = vmatpush1.msra.mxu0 0.0
    %1511 = vmatprep.subr.mxu0 0.0
    %1512 = vmatpush1.msra.mxu0 0.0
    %1513 = vmatprep.subr.mxu0 0.0
    %1514 = vmatpush1.msra.mxu0 0.0
    %1515 = vmatprep.subr.mxu0 0.0
    %1516 = vmatpush1.msra.mxu0 0.0
    %1517 = vmatprep.subr.mxu0 0.0
    %1518 = vmatpush1.msra.mxu0 0.0
    %1519 = vmatprep.subr.mxu0 0.0
    %1520 = vmatpush1.msra.mxu0 0.0
    %1521 = vmatprep.subr.mxu0 0.0
    %1522 = vmatpush1.msra.mxu0 0.0
    %1523 = vmatprep.subr.mxu0 0.0
    %1524 = vmatpush1.msra.mxu0 0.0
    %1525 = vmatprep.subr.mxu0 0.0
    %1526 = vmatpush1.msra.mxu0 0.0
    %1527 = vmatprep.subr.mxu0 0.0
    %1528 = vmatpush1.msra.mxu0 0.0
    %1529 = vmatprep.subr.mxu0 0.0
    %1530 = vmatpush1.msra.mxu0 0.0
    %1531 = vmatprep.subr.mxu0 0.0
    %1532 = vmatpush1.msra.mxu0 0.0
    %1533 = vmatprep.subr.mxu0 0.0
    %1534 = vmatpush1.msra.mxu0 0.0
    %1535 = vmatprep.subr.mxu0 0.0
    %1536 = vmatpush1.msra.mxu0 0.0
    %1537 = vmatprep.subr.mxu0 0.0
    %1538 = vmatpush1.msra.mxu0 0.0
    %1539 = vmatprep.subr.mxu0 0.0
    %1540 = vmatpush1.msra.mxu0 0.0
    %1541 = vmatprep.subr.mxu0 0.0
    %1542 = vmatpush1.msra.mxu0 0.0
    %1543 = vmatprep.subr.mxu0 0.0
    %1544 = vmatpush1.msra.mxu0 0.0
    %1545 = vmatprep.subr.mxu0 0.0
    %1546 = vmatpush1.msra.mxu0 0.0
    %1547 = vmatprep.subr.mxu0 0.0
    %1548 = vmatpush1.msra.mxu0 0.0
    %1549 = vmatprep.mubr.f32.mxu0 0.0
    %1550 = vmatmul.mubr.f32.gmra.mrb[0].mxu0 %v1483
    %v1551 = vpop.f32.mrb[0].mxu0
    %v1552 = vadd.f32 0.0, %v1551
    %v1553 = vpop.f32.mrb[0].mxu0
    %1554 = vdwg.mxu0
    %v1556 = vsel %vm192, %v1313, 0
    %1558 = vmatprep.subr.mxu0 0.0
    %1559 = vmatpush1.msra.mxu0 %v355
    %1560 = vmatprep.subr.mxu0 0.0
    %1561 = vmatpush1.msra.mxu0 0.0
    %1562 = vmatprep.subr.mxu0 0.0
    %1563 = vmatpush1.msra.mxu0 0.0
    %1564 = vmatprep.subr.mxu0 0.0
    %1565 = vmatpush1.msra.mxu0 0.0
    %1566 = vmatprep.subr.mxu0 0.0
    %1567 = vmatpush1.msra.mxu0 0.0
    %1568 = vmatprep.subr.mxu0 0.0
    %1569 = vmatpush1.msra.mxu0 0.0
    %1570 = vmatprep.subr.mxu0 0.0
    %1571 = vmatpush1.msra.mxu0 0.0
    %1572 = vmatprep.subr.mxu0 0.0
    %1573 = vmatpush1.msra.mxu0 0.0
    %1574 = vmatprep.subr.mxu0 0.0
    %1575 = vmatpush1.msra.mxu0 0.0
    %1576 = vmatprep.subr.mxu0 0.0
    %1577 = vmatpush1.msra.mxu0 0.0
    %1578 = vmatprep.subr.mxu0 0.0
    %1579 = vmatpush1.msra.mxu0 0.0
    %1580 = vmatprep.subr.mxu0 0.0
    %1581 = vmatpush1.msra.mxu0 0.0
    %1582 = vmatprep.subr.mxu0 0.0
    %1583 = vmatpush1.msra.mxu0 0.0
    %1584 = vmatprep.subr.mxu0 0.0
    %1585 = vmatpush1.msra.mxu0 0.0
    %1586 = vmatprep.subr.mxu0 0.0
    %1587 = vmatpush1.msra.mxu0 0.0
    %1588 = vmatprep.subr.mxu0 0.0
    %1589 = vmatpush1.msra.mxu0 0.0
    %1590 = vmatprep.subr.mxu0 0.0
    %1591 = vmatpush1.msra.mxu0 0.0
    %1592 = vmatprep.subr.mxu0 0.0
    %1593 = vmatpush1.msra.mxu0 0.0
    %1594 = vmatprep.subr.mxu0 0.0
    %1595 = vmatpush1.msra.mxu0 0.0
    %1596 = vmatprep.subr.mxu0 0.0
    %1597 = vmatpush1.msra.mxu0 0.0
    %1598 = vmatprep.subr.mxu0 0.0
    %1599 = vmatpush1.msra.mxu0 0.0
    %1600 = vmatprep.subr.mxu0 0.0
    %1601 = vmatpush1.msra.mxu0 0.0
    %1602 = vmatprep.subr.mxu0 0.0
    %1603 = vmatpush1.msra.mxu0 0.0
    %1604 = vmatprep.subr.mxu0 0.0
    %1605 = vmatpush1.msra.mxu0 0.0
    %1606 = vmatprep.subr.mxu0 0.0
    %1607 = vmatpush1.msra.mxu0 0.0
    %1608 = vmatprep.subr.mxu0 0.0
    %1609 = vmatpush1.msra.mxu0 0.0
    %1610 = vmatprep.subr.mxu0 0.0
    %1611 = vmatpush1.msra.mxu0 0.0
    %1612 = vmatprep.subr.mxu0 0.0
    %1613 = vmatpush1.msra.mxu0 0.0
    %1614 = vmatprep.subr.mxu0 0.0
    %1615 = vmatpush1.msra.mxu0 0.0
    %1616 = vmatprep.subr.mxu0 0.0
    %1617 = vmatpush1.msra.mxu0 0.0
    %1618 = vmatprep.subr.mxu0 0.0
    %1619 = vmatpush1.msra.mxu0 0.0
    %1620 = vmatprep.subr.mxu0 0.0
    %1621 = vmatpush1.msra.mxu0 0.0
    %1622 = vmatprep.mubr.f32.mxu0 0.0
    %1623 = vmatmul.mubr.f32.gmra.mrb[0].mxu0 %v1556
    %v1624 = vpop.f32.mrb[0].mxu0
    %v1625 = vadd.f32 %v1552, %v1624
    %v1626 = vpop.f32.mrb[0].mxu0
    %1627 = vdwg.mxu0
    %1628 = vrot.lane.b32.xlu0 %v186, 112
    %v1629 = vpop.permute.xlu0 %1628
    %1630 = vrot.lane.b32.xlu0 %v186, 80
    %v1631 = vpop.permute.xlu0 %1630
    %v1632 = vsel %vm192, %v1629, 0
    %v1634 = vsel %vm192, %v1631, 0
    %1636 = vmatprep.subr.mxu0 0.0
    %1637 = vmatpush1.xpose.msra.mxu0 %v1634
    %1638 = vmatprep.subr.mxu0 0.0
    %1639 = vmatpush1.xpose.msra.mxu0 0.0
    %1640 = vmatprep.subr.mxu0 0.0
    %1641 = vmatpush1.xpose.msra.mxu0 0.0
    %1642 = vmatprep.subr.mxu0 0.0
    %1643 = vmatpush1.xpose.msra.mxu0 0.0
    %1644 = vmatprep.subr.mxu0 0.0
    %1645 = vmatpush1.xpose.msra.mxu0 0.0
    %1646 = vmatprep.subr.mxu0 0.0
    %1647 = vmatpush1.xpose.msra.mxu0 0.0
    %1648 = vmatprep.subr.mxu0 0.0
    %1649 = vmatpush1.xpose.msra.mxu0 0.0
    %1650 = vmatprep.subr.mxu0 0.0
    %1651 = vmatpush1.xpose.msra.mxu0 0.0
    %1652 = vmatprep.subr.mxu0 0.0
    %1653 = vmatpush1.xpose.msra.mxu0 0.0
    %1654 = vmatprep.subr.mxu0 0.0
    %1655 = vmatpush1.xpose.msra.mxu0 0.0
    %1656 = vmatprep.subr.mxu0 0.0
    %1657 = vmatpush1.xpose.msra.mxu0 0.0
    %1658 = vmatprep.subr.mxu0 0.0
    %1659 = vmatpush1.xpose.msra.mxu0 0.0
    %1660 = vmatprep.subr.mxu0 0.0
    %1661 = vmatpush1.xpose.msra.mxu0 0.0
    %1662 = vmatprep.subr.mxu0 0.0
    %1663 = vmatpush1.xpose.msra.mxu0 0.0
    %1664 = vmatprep.subr.mxu0 0.0
    %1665 = vmatpush1.xpose.msra.mxu0 0.0
    %1666 = vmatprep.subr.mxu0 0.0
    %1667 = vmatpush1.xpose.msra.mxu0 0.0
    %1668 = vmatprep.subr.mxu0 0.0
    %1669 = vmatpush1.xpose.msra.mxu0 0.0
    %1670 = vmatprep.subr.mxu0 0.0
    %1671 = vmatpush1.xpose.msra.mxu0 0.0
    %1672 = vmatprep.subr.mxu0 0.0
    %1673 = vmatpush1.xpose.msra.mxu0 0.0
    %1674 = vmatprep.subr.mxu0 0.0
    %1675 = vmatpush1.xpose.msra.mxu0 0.0
    %1676 = vmatprep.subr.mxu0 0.0
    %1677 = vmatpush1.xpose.msra.mxu0 0.0
    %1678 = vmatprep.subr.mxu0 0.0
    %1679 = vmatpush1.xpose.msra.mxu0 0.0
    %1680 = vmatprep.subr.mxu0 0.0
    %1681 = vmatpush1.xpose.msra.mxu0 0.0
    %1682 = vmatprep.subr.mxu0 0.0
    %1683 = vmatpush1.xpose.msra.mxu0 0.0
    %1684 = vmatprep.subr.mxu0 0.0
    %1685 = vmatpush1.xpose.msra.mxu0 0.0
    %1686 = vmatprep.subr.mxu0 0.0
    %1687 = vmatpush1.xpose.msra.mxu0 0.0
    %1688 = vmatprep.subr.mxu0 0.0
    %1689 = vmatpush1.xpose.msra.mxu0 0.0
    %1690 = vmatprep.subr.mxu0 0.0
    %1691 = vmatpush1.xpose.msra.mxu0 0.0
    %1692 = vmatprep.subr.mxu0 0.0
    %1693 = vmatpush1.xpose.msra.mxu0 0.0
    %1694 = vmatprep.subr.mxu0 0.0
    %1695 = vmatpush1.xpose.msra.mxu0 0.0
    %1696 = vmatprep.subr.mxu0 0.0
    %1697 = vmatpush1.xpose.msra.mxu0 0.0
    %1698 = vmatprep.subr.mxu0 0.0
    %1699 = vmatpush1.xpose.msra.mxu0 0.0
    %1700 = vmatprep.mubr.f32.mxu0 0.0
    %1701 = vmatmul.mubr.f32.gmra.mrb[0].mxu0 %v1632
    %v1702 = vpop.f32.mrb[0].mxu0
    %v1703 = vadd.f32 0.0, %v1702
    %v1704 = vpop.f32.mrb[0].mxu0
    %1705 = vdwg.mxu0
    %v1706 = vmul.f32 %v1703, 0.35355338
    %v1707 = vsel %vm192, %v1706, -inf
    %1708 = vmax.xlane.f32.xlu0 %v1707
    %v1709 = vpop.xlane.xlu0 %1708
    %v1710 = vsub.f32 %v1706, %v1709
    %v1711 = vmul.f32 %v1710, 1.442695
    %v1712 = vpow.pop %v1711
    %v1713 = vsel %vm192, %v1712, 0.0
    %1714 = vadd.xlane.f32.xlu0 %v1713
    %v1715 = vpop.xlane.xlu0 %1714
    %v1716 = vrcp.pop %v1715
    %v1717 = vmul.f32 %v1712, %v1716
    %1718 = vrot.lane.b32.xlu0 %v186, 48
    %v1719 = vpop.permute.xlu0 %1718
    %v1722 = vsel %vm192, %v1717, 0
    %1724 = vmatprep.subr.mxu0 0.0
    %1725 = vmatpush1.msra.mxu0 %v1719
    %1726 = vmatprep.subr.mxu0 0.0
    %1727 = vmatpush1.msra.mxu0 0.0
    %1728 = vmatprep.subr.mxu0 0.0
    %1729 = vmatpush1.msra.mxu0 0.0
    %1730 = vmatprep.subr.mxu0 0.0
    %1731 = vmatpush1.msra.mxu0 0.0
    %1732 = vmatprep.subr.mxu0 0.0
    %1733 = vmatpush1.msra.mxu0 0.0
    %1734 = vmatprep.subr.mxu0 0.0
    %1735 = vmatpush1.msra.mxu0 0.0
    %1736 = vmatprep.subr.mxu0 0.0
    %1737 = vmatpush1.msra.mxu0 0.0
    %1738 = vmatprep.subr.mxu0 0.0
    %1739 = vmatpush1.msra.mxu0 0.0
    %1740 = vmatprep.subr.mxu0 0.0
    %1741 = vmatpush1.msra.mxu0 0.0
    %1742 = vmatprep.subr.mxu0 0.0
    %1743 = vmatpush1.msra.mxu0 0.0
    %1744 = vmatprep.subr.mxu0 0.0
    %1745 = vmatpush1.msra.mxu0 0.0
    %1746 = vmatprep.subr.mxu0 0.0
    %1747 = vmatpush1.msra.mxu0 0.0
    %1748 = vmatprep.subr.mxu0 0.0
    %1749 = vmatpush1.msra.mxu0 0.0
    %1750 = vmatprep.subr.mxu0 0.0
    %1751 = vmatpush1.msra.mxu0 0.0
    %1752 = vmatprep.subr.mxu0 0.0
    %1753 = vmatpush1.msra.mxu0 0.0
    %1754 = vmatprep.subr.mxu0 0.0
    %1755 = vmatpush1.msra.mxu0 0.0
    %1756 = vmatprep.subr.mxu0 0.0
    %1757 = vmatpush1.msra.mxu0 0.0
    %1758 = vmatprep.subr.mxu0 0.0
    %1759 = vmatpush1.msra.mxu0 0.0
    %1760 = vmatprep.subr.mxu0 0.0
    %1761 = vmatpush1.msra.mxu0 0.0
    %1762 = vmatprep.subr.mxu0 0.0
    %1763 = vmatpush1.msra.mxu0 0.0
    %1764 = vmatprep.subr.mxu0 0.0
    %1765 = vmatpush1.msra.mxu0 0.0
    %1766 = vmatprep.subr.mxu0 0.0
    %1767 = vmatpush1.msra.mxu0 0.0
    %1768 = vmatprep.subr.mxu0 0.0
    %1769 = vmatpush1.msra.mxu0 0.0
    %1770 = vmatprep.subr.mxu0 0.0
    %1771 = vmatpush1.msra.mxu0 0.0
    %1772 = vmatprep.subr.mxu0 0.0
    %1773 = vmatpush1.msra.mxu0 0.0
    %1774 = vmatprep.subr.mxu0 0.0
    %1775 = vmatpush1.msra.mxu0 0.0
    %1776 = vmatprep.subr.mxu0 0.0
    %1777 = vmatpush1.msra.mxu0 0.0
    %1778 = vmatprep.subr.mxu0 0.0
    %1779 = vmatpush1.msra.mxu0 0.0
    %1780 = vmatprep.subr.mxu0 0.0
    %1781 = vmatpush1.msra.mxu0 0.0
    %1782 = vmatprep.subr.mxu0 0.0
    %1783 = vmatpush1.msra.mxu0 0.0
    %1784 = vmatprep.subr.mxu0 0.0
    %1785 = vmatpush1.msra.mxu0 0.0
    %1786 = vmatprep.subr.mxu0 0.0
    %1787 = vmatpush1.msra.mxu0 0.0
    %1788 = vmatprep.mubr.f32.mxu0 0.0
    %1789 = vmatmul.mubr.f32.gmra.mrb[0].mxu0 %v1722
    %v1790 = vpop.f32.mrb[0].mxu0
    %v1791 = vadd.f32 0.0, %v1790
    %v1792 = vpop.f32.mrb[0].mxu0
    %1793 = vdwg.mxu0
    %v1795 = vsel %vm192, %v1791, 0
    %1797 = vmatprep.subr.mxu0 0.0
    %1798 = vmatpush1.msra.mxu0 %v835
    %1799 = vmatprep.subr.mxu0 0.0
    %1800 = vmatpush1.msra.mxu0 0.0
    %1801 = vmatprep.subr.mxu0 0.0
    %1802 = vmatpush1.msra.mxu0 0.0
    %1803 = vmatprep.subr.mxu0 0.0
    %1804 = vmatpush1.msra.mxu0 0.0
    %1805 = vmatprep.subr.mxu0 0.0
    %1806 = vmatpush1.msra.mxu0 0.0
    %1807 = vmatprep.subr.mxu0 0.0
    %1808 = vmatpush1.msra.mxu0 0.0
    %1809 = vmatprep.subr.mxu0 0.0
    %1810 = vmatpush1.msra.mxu0 0.0
    %1811 = vmatprep.subr.mxu0 0.0
    %1812 = vmatpush1.msra.mxu0 0.0
    %1813 = vmatprep.subr.mxu0 0.0
    %1814 = vmatpush1.msra.mxu0 0.0
    %1815 = vmatprep.subr.mxu0 0.0
    %1816 = vmatpush1.msra.mxu0 0.0
    %1817 = vmatprep.subr.mxu0 0.0
    %1818 = vmatpush1.msra.mxu0 0.0
    %1819 = vmatprep.subr.mxu0 0.0
    %1820 = vmatpush1.msra.mxu0 0.0
    %1821 = vmatprep.subr.mxu0 0.0
    %1822 = vmatpush1.msra.mxu0 0.0
    %1823 = vmatprep.subr.mxu0 0.0
    %1824 = vmatpush1.msra.mxu0 0.0
    %1825 = vmatprep.subr.mxu0 0.0
    %1826 = vmatpush1.msra.mxu0 0.0
    %1827 = vmatprep.subr.mxu0 0.0
    %1828 = vmatpush1.msra.mxu0 0.0
    %1829 = vmatprep.subr.mxu0 0.0
    %1830 = vmatpush1.msra.mxu0 0.0
    %1831 = vmatprep.subr.mxu0 0.0
    %1832 = vmatpush1.msra.mxu0 0.0
    %1833 = vmatprep.subr.mxu0 0.0
    %1834 = vmatpush1.msra.mxu0 0.0
    %1835 = vmatprep.subr.mxu0 0.0
    %1836 = vmatpush1.msra.mxu0 0.0
    %1837 = vmatprep.subr.mxu0 0.0
    %1838 = vmatpush1.msra.mxu0 0.0
    %1839 = vmatprep.subr.mxu0 0.0
    %1840 = vmatpush1.msra.mxu0 0.0
    %1841 = vmatprep.subr.mxu0 0.0
    %1842 = vmatpush1.msra.mxu0 0.0
    %1843 = vmatprep.subr.mxu0 0.0
    %1844 = vmatpush1.msra.mxu0 0.0
    %1845 = vmatprep.subr.mxu0 0.0
    %1846 = vmatpush1.msra.mxu0 0.0
    %1847 = vmatprep.subr.mxu0 0.0
    %1848 = vmatpush1.msra.mxu0 0.0
    %1849 = vmatprep.subr.mxu0 0.0
    %1850 = vmatpush1.msra.mxu0 0.0
    %1851 = vmatprep.subr.mxu0 0.0
    %1852 = vmatpush1.msra.mxu0 0.0
    %1853 = vmatprep.subr.mxu0 0.0
    %1854 = vmatpush1.msra.mxu0 0.0
    %1855 = vmatprep.subr.mxu0 0.0
    %1856 = vmatpush1.msra.mxu0 0.0
    %1857 = vmatprep.subr.mxu0 0.0
    %1858 = vmatpush1.msra.mxu0 0.0
    %1859 = vmatprep.subr.mxu0 0.0
    %1860 = vmatpush1.msra.mxu0 0.0
    %1861 = vmatprep.mubr.f32.mxu0 0.0
    %1862 = vmatmul.mubr.f32.gmra.mrb[0].mxu0 %v1795
    %v1863 = vpop.f32.mrb[0].mxu0
    %v1864 = vadd.f32 0.0, %v1863
    %v1865 = vpop.f32.mrb[0].mxu0
    %1866 = vdwg.mxu0
    %v1867 = vadd.f32 %v1625, %v1864
    %1868 = vrot.lane.b32.xlu0 %v186, 104
    %v1869 = vpop.permute.xlu0 %1868
    %1870 = vrot.lane.b32.xlu0 %v186, 72
    %v1871 = vpop.permute.xlu0 %1870
    %v1872 = vsel %vm192, %v1869, 0
    %v1874 = vsel %vm192, %v1871, 0
    %1876 = vmatprep.subr.mxu0 0.0
    %1877 = vmatpush1.xpose.msra.mxu0 %v1874
    %1878 = vmatprep.subr.mxu0 0.0
    %1879 = vmatpush1.xpose.msra.mxu0 0.0
    %1880 = vmatprep.subr.mxu0 0.0
    %1881 = vmatpush1.xpose.msra.mxu0 0.0
    %1882 = vmatprep.subr.mxu0 0.0
    %1883 = vmatpush1.xpose.msra.mxu0 0.0
    %1884 = vmatprep.subr.mxu0 0.0
    %1885 = vmatpush1.xpose.msra.mxu0 0.0
    %1886 = vmatprep.subr.mxu0 0.0
    %1887 = vmatpush1.xpose.msra.mxu0 0.0
    %1888 = vmatprep.subr.mxu0 0.0
    %1889 = vmatpush1.xpose.msra.mxu0 0.0
    %1890 = vmatprep.subr.mxu0 0.0
    %1891 = vmatpush1.xpose.msra.mxu0 0.0
    %1892 = vmatprep.subr.mxu0 0.0
    %1893 = vmatpush1.xpose.msra.mxu0 0.0
    %1894 = vmatprep.subr.mxu0 0.0
    %1895 = vmatpush1.xpose.msra.mxu0 0.0
    %1896 = vmatprep.subr.mxu0 0.0
    %1897 = vmatpush1.xpose.msra.mxu0 0.0
    %1898 = vmatprep.subr.mxu0 0.0
    %1899 = vmatpush1.xpose.msra.mxu0 0.0
    %1900 = vmatprep.subr.mxu0 0.0
    %1901 = vmatpush1.xpose.msra.mxu0 0.0
    %1902 = vmatprep.subr.mxu0 0.0
    %1903 = vmatpush1.xpose.msra.mxu0 0.0
    %1904 = vmatprep.subr.mxu0 0.0
    %1905 = vmatpush1.xpose.msra.mxu0 0.0
    %1906 = vmatprep.subr.mxu0 0.0
    %1907 = vmatpush1.xpose.msra.mxu0 0.0
    %1908 = vmatprep.subr.mxu0 0.0
    %1909 = vmatpush1.xpose.msra.mxu0 0.0
    %1910 = vmatprep.subr.mxu0 0.0
    %1911 = vmatpush1.xpose.msra.mxu0 0.0
    %1912 = vmatprep.subr.mxu0 0.0
    %1913 = vmatpush1.xpose.msra.mxu0 0.0
    %1914 = vmatprep.subr.mxu0 0.0
    %1915 = vmatpush1.xpose.msra.mxu0 0.0
    %1916 = vmatprep.subr.mxu0 0.0
    %1917 = vmatpush1.xpose.msra.mxu0 0.0
    %1918 = vmatprep.subr.mxu0 0.0
    %1919 = vmatpush1.xpose.msra.mxu0 0.0
    %1920 = vmatprep.subr.mxu0 0.0
    %1921 = vmatpush1.xpose.msra.mxu0 0.0
    %1922 = vmatprep.subr.mxu0 0.0
    %1923 = vmatpush1.xpose.msra.mxu0 0.0
    %1924 = vmatprep.subr.mxu0 0.0
    %1925 = vmatpush1.xpose.msra.mxu0 0.0
    %1926 = vmatprep.subr.mxu0 0.0
    %1927 = vmatpush1.xpose.msra.mxu0 0.0
    %1928 = vmatprep.subr.mxu0 0.0
    %1929 = vmatpush1.xpose.msra.mxu0 0.0
    %1930 = vmatprep.subr.mxu0 0.0
    %1931 = vmatpush1.xpose.msra.mxu0 0.0
    %1932 = vmatprep.subr.mxu0 0.0
    %1933 = vmatpush1.xpose.msra.mxu0 0.0
    %1934 = vmatprep.subr.mxu0 0.0
    %1935 = vmatpush1.xpose.msra.mxu0 0.0
    %1936 = vmatprep.subr.mxu0 0.0
    %1937 = vmatpush1.xpose.msra.mxu0 0.0
    %1938 = vmatprep.subr.mxu0 0.0
    %1939 = vmatpush1.xpose.msra.mxu0 0.0
    %1940 = vmatprep.mubr.f32.mxu0 0.0
    %1941 = vmatmul.mubr.f32.gmra.mrb[0].mxu0 %v1872
    %v1942 = vpop.f32.mrb[0].mxu0
    %v1943 = vadd.f32 0.0, %v1942
    %v1944 = vpop.f32.mrb[0].mxu0
    %1945 = vdwg.mxu0
    %v1946 = vmul.f32 %v1943, 0.35355338
    %v1947 = vsel %vm192, %v1946, -inf
    %1948 = vmax.xlane.f32.xlu0 %v1947
    %v1949 = vpop.xlane.xlu0 %1948
    %v1950 = vsub.f32 %v1946, %v1949
    %v1951 = vmul.f32 %v1950, 1.442695
    %v1952 = vpow.pop %v1951
    %v1953 = vsel %vm192, %v1952, 0.0
    %1954 = vadd.xlane.f32.xlu0 %v1953
    %v1955 = vpop.xlane.xlu0 %1954
    %v1956 = vrcp.pop %v1955
    %v1957 = vmul.f32 %v1952, %v1956
    %1958 = vrot.lane.b32.xlu0 %v186, 40
    %v1959 = vpop.permute.xlu0 %1958
    %v1962 = vsel %vm192, %v1957, 0
    %1964 = vmatprep.subr.mxu0 0.0
    %1965 = vmatpush1.msra.mxu0 %v1959
    %1966 = vmatprep.subr.mxu0 0.0
    %1967 = vmatpush1.msra.mxu0 0.0
    %1968 = vmatprep.subr.mxu0 0.0
    %1969 = vmatpush1.msra.mxu0 0.0
    %1970 = vmatprep.subr.mxu0 0.0
    %1971 = vmatpush1.msra.mxu0 0.0
    %1972 = vmatprep.subr.mxu0 0.0
    %1973 = vmatpush1.msra.mxu0 0.0
    %1974 = vmatprep.subr.mxu0 0.0
    %1975 = vmatpush1.msra.mxu0 0.0
    %1976 = vmatprep.subr.mxu0 0.0
    %1977 = vmatpush1.msra.mxu0 0.0
    %1978 = vmatprep.subr.mxu0 0.0
    %1979 = vmatpush1.msra.mxu0 0.0
    %1980 = vmatprep.subr.mxu0 0.0
    %1981 = vmatpush1.msra.mxu0 0.0
    %1982 = vmatprep.subr.mxu0 0.0
    %1983 = vmatpush1.msra.mxu0 0.0
    %1984 = vmatprep.subr.mxu0 0.0
    %1985 = vmatpush1.msra.mxu0 0.0
    %1986 = vmatprep.subr.mxu0 0.0
    %1987 = vmatpush1.msra.mxu0 0.0
    %1988 = vmatprep.subr.mxu0 0.0
    %1989 = vmatpush1.msra.mxu0 0.0
    %1990 = vmatprep.subr.mxu0 0.0
    %1991 = vmatpush1.msra.mxu0 0.0
    %1992 = vmatprep.subr.mxu0 0.0
    %1993 = vmatpush1.msra.mxu0 0.0
    %1994 = vmatprep.subr.mxu0 0.0
    %1995 = vmatpush1.msra.mxu0 0.0
    %1996 = vmatprep.subr.mxu0 0.0
    %1997 = vmatpush1.msra.mxu0 0.0
    %1998 = vmatprep.subr.mxu0 0.0
    %1999 = vmatpush1.msra.mxu0 0.0
    %2000 = vmatprep.subr.mxu0 0.0
    %2001 = vmatpush1.msra.mxu0 0.0
    %2002 = vmatprep.subr.mxu0 0.0
    %2003 = vmatpush1.msra.mxu0 0.0
    %2004 = vmatprep.subr.mxu0 0.0
    %2005 = vmatpush1.msra.mxu0 0.0
    %2006 = vmatprep.subr.mxu0 0.0
    %2007 = vmatpush1.msra.mxu0 0.0
    %2008 = vmatprep.subr.mxu0 0.0
    %2009 = vmatpush1.msra.mxu0 0.0
    %2010 = vmatprep.subr.mxu0 0.0
    %2011 = vmatpush1.msra.mxu0 0.0
    %2012 = vmatprep.subr.mxu0 0.0
    %2013 = vmatpush1.msra.mxu0 0.0
    %2014 = vmatprep.subr.mxu0 0.0
    %2015 = vmatpush1.msra.mxu0 0.0
    %2016 = vmatprep.subr.mxu0 0.0
    %2017 = vmatpush1.msra.mxu0 0.0
    %2018 = vmatprep.subr.mxu0 0.0
    %2019 = vmatpush1.msra.mxu0 0.0
    %2020 = vmatprep.subr.mxu0 0.0
    %2021 = vmatpush1.msra.mxu0 0.0
    %2022 = vmatprep.subr.mxu0 0.0
    %2023 = vmatpush1.msra.mxu0 0.0
    %2024 = vmatprep.subr.mxu0 0.0
    %2025 = vmatpush1.msra.mxu0 0.0
    %2026 = vmatprep.subr.mxu0 0.0
    %2027 = vmatpush1.msra.mxu0 0.0
    %2028 = vmatprep.mubr.f32.mxu0 0.0
    %2029 = vmatmul.mubr.f32.gmra.mrb[0].mxu0 %v1962
    %v2030 = vpop.f32.mrb[0].mxu0
    %v2031 = vadd.f32 0.0, %v2030
    %v2032 = vpop.f32.mrb[0].mxu0
    %2033 = vdwg.mxu0
    %v2035 = vsel %vm192, %v2031, 0
    %2037 = vmatprep.subr.mxu0 0.0
    %2038 = vmatpush1.msra.mxu0 %v1076
    %2039 = vmatprep.subr.mxu0 0.0
    %2040 = vmatpush1.msra.mxu0 0.0
    %2041 = vmatprep.subr.mxu0 0.0
    %2042 = vmatpush1.msra.mxu0 0.0
    %2043 = vmatprep.subr.mxu0 0.0
    %2044 = vmatpush1.msra.mxu0 0.0
    %2045 = vmatprep.subr.mxu0 0.0
    %2046 = vmatpush1.msra.mxu0 0.0
    %2047 = vmatprep.subr.mxu0 0.0
    %2048 = vmatpush1.msra.mxu0 0.0
    %2049 = vmatprep.subr.mxu0 0.0
    %2050 = vmatpush1.msra.mxu0 0.0
    %2051 = vmatprep.subr.mxu0 0.0
    %2052 = vmatpush1.msra.mxu0 0.0
    %2053 = vmatprep.subr.mxu0 0.0
    %2054 = vmatpush1.msra.mxu0 0.0
    %2055 = vmatprep.subr.mxu0 0.0
    %2056 = vmatpush1.msra.mxu0 0.0
    %2057 = vmatprep.subr.mxu0 0.0
    %2058 = vmatpush1.msra.mxu0 0.0
    %2059 = vmatprep.subr.mxu0 0.0
    %2060 = vmatpush1.msra.mxu0 0.0
    %2061 = vmatprep.subr.mxu0 0.0
    %2062 = vmatpush1.msra.mxu0 0.0
    %2063 = vmatprep.subr.mxu0 0.0
    %2064 = vmatpush1.msra.mxu0 0.0
    %2065 = vmatprep.subr.mxu0 0.0
    %2066 = vmatpush1.msra.mxu0 0.0
    %2067 = vmatprep.subr.mxu0 0.0
    %2068 = vmatpush1.msra.mxu0 0.0
    %2069 = vmatprep.subr.mxu0 0.0
    %2070 = vmatpush1.msra.mxu0 0.0
    %2071 = vmatprep.subr.mxu0 0.0
    %2072 = vmatpush1.msra.mxu0 0.0
    %2073 = vmatprep.subr.mxu0 0.0
    %2074 = vmatpush1.msra.mxu0 0.0
    %2075 = vmatprep.subr.mxu0 0.0
    %2076 = vmatpush1.msra.mxu0 0.0
    %2077 = vmatprep.subr.mxu0 0.0
    %2078 = vmatpush1.msra.mxu0 0.0
    %2079 = vmatprep.subr.mxu0 0.0
    %2080 = vmatpush1.msra.mxu0 0.0
    %2081 = vmatprep.subr.mxu0 0.0
    %2082 = vmatpush1.msra.mxu0 0.0
    %2083 = vmatprep.subr.mxu0 0.0
    %2084 = vmatpush1.msra.mxu0 0.0
    %2085 = vmatprep.subr.mxu0 0.0
    %2086 = vmatpush1.msra.mxu0 0.0
    %2087 = vmatprep.subr.mxu0 0.0
    %2088 = vmatpush1.msra.mxu0 0.0
    %2089 = vmatprep.subr.mxu0 0.0
    %2090 = vmatpush1.msra.mxu0 0.0
    %2091 = vmatprep.subr.mxu0 0.0
    %2092 = vmatpush1.msra.mxu0 0.0
    %2093 = vmatprep.subr.mxu0 0.0
    %2094 = vmatpush1.msra.mxu0 0.0
    %2095 = vmatprep.subr.mxu0 0.0
    %2096 = vmatpush1.msra.mxu0 0.0
    %2097 = vmatprep.subr.mxu0 0.0
    %2098 = vmatpush1.msra.mxu0 0.0
    %2099 = vmatprep.subr.mxu0 0.0
    %2100 = vmatpush1.msra.mxu0 0.0
    %2101 = vmatprep.mubr.f32.mxu0 0.0
    %2102 = vmatmul.mubr.f32.gmra.mrb[0].mxu0 %v2035
    %v2103 = vpop.f32.mrb[0].mxu0
    %v2104 = vadd.f32 0.0, %v2103
    %v2105 = vpop.f32.mrb[0].mxu0
    %2106 = vdwg.mxu0
    %v2107 = vadd.f32 %v1867, %v2104
    %v2108 = vld [vmem:[%s4] sm:$0x1]
    %v2110 = vlaneseq
    %v2111 = vshrl.u32 %v2110, 7
    %v2112 = vsub.s32 0, %v2111
    %v2113 = vrot.slane %v2108, %v2112
    %v2115 = vadd.f32 %v1150, %v2113
    %v2116 = vadd.f32 %v2107, %v2113
    %v2117 = vadd.f32 %v2115, %v94
    %v2118 = vadd.f32 %v2116, %v95
    %v2119 = vsel %vm107, %v2117, 0.0
    %2120 = vadd.xlane.f32.xlu0 %v2119
    %v2121 = vpop.xlane.xlu0 %2120
    %v2122 = vsel %vm107, %v2118, 0.0
    %2123 = vadd.xlane.f32.xlu0 %v2122
    %v2124 = vpop.xlane.xlu0 %2123
    %v2125 = vrcp.pop 32.0
    %v2126 = vmul.f32 %v2121, %v2125
    %v2127 = vmul.f32 %v2124, %v2125
    %v2128 = vsub.f32 %v2117, %v2126
    %v2129 = vsub.f32 %v2118, %v2127
    %v2130 = vmul.f32 %v2128, %v2128
    %v2131 = vmul.f32 %v2129, %v2129
    %v2132 = vsel %vm107, %v2130, 0.0
    %2133 = vadd.xlane.f32.xlu0 %v2132
    %v2134 = vpop.xlane.xlu0 %2133
    %v2135 = vsel %vm107, %v2131, 0.0
    %2136 = vadd.xlane.f32.xlu0 %v2135
    %v2137 = vpop.xlane.xlu0 %2136
    %v2138 = vmul.f32 %v2134, %v2125
    %v2139 = vmul.f32 %v2137, %v2125
    %v2140 = vadd.f32 %v2138, 1e-06
    %v2141 = vadd.f32 %v2139, 1e-06
    %v2142 = vrsqrt.pop %v2140
    %v2143 = vrsqrt.pop %v2141
    %v2144 = vmul.f32 %v2128, %v2142
    %v2145 = vmul.f32 %v2129, %v2143
    %v2146 = vld [vmem:[#allocation5] sm:$0x1]
    %v2148 = vlaneseq
    %v2149 = vshrl.u32 %v2148, 7
    %v2150 = vsub.s32 0, %v2149
    %v2151 = vrot.slane %v2146, %v2150
    %v2153 = vmul.f32 %v2144, %v2151
    %v2154 = vmul.f32 %v2145, %v2151
    %v2155 = vld [vmem:[#allocation7] sm:$0x1]
    %v2157 = vlaneseq
    %v2158 = vshrl.u32 %v2157, 7
    %v2159 = vsub.s32 0, %v2158
    %v2160 = vrot.slane %v2155, %v2159
    %v2162 = vadd.f32 %v2153, %v2160
    %v2163 = vadd.f32 %v2154, %v2160
    %v2164 = vld [vmem:[%s7] sm:$0xff]
    %v2165 = vld [vmem:[%s7 + $0x8] sm:$0xff]
    %v2166 = vld [vmem:[%s7 + $0x10] sm:$0xff]
    %v2167 = vld [vmem:[%s7 + $0x18] sm:$0xff]
    %v2168 = vld [vmem:[#allocation8] sm:$0x1]
    %v2170 = vlaneseq
    %v2171 = vshrl.u32 %v2170, 7
    %v2172 = vsub.s32 0, %v2171
    %v2173 = vrot.slane %v2168, %v2172
    %v2176 = vsel %vm107, %v2162, 0
    %v2179 = vsel %vm107, %v2163, 0
    %2181 = vmatprep.subr.mxu0 0.0
    %2182 = vmatpush1.msra.mxu0 %v2164
    %2183 = vmatprep.subr.mxu0 0.0
    %2184 = vmatpush1.msra.mxu0 %v2165
    %2185 = vmatprep.subr.mxu0 0.0
    %2186 = vmatpush1.msra.mxu0 %v2166
    %2187 = vmatprep.subr.mxu0 0.0
    %2188 = vmatpush1.msra.mxu0 %v2167
    %2189 = vmatprep.subr.mxu0 0.0
    %2190 = vmatpush1.msra.mxu0 0.0
    %2191 = vmatprep.subr.mxu0 0.0
    %2192 = vmatpush1.msra.mxu0 0.0
    %2193 = vmatprep.subr.mxu0 0.0
    %2194 = vmatpush1.msra.mxu0 0.0
    %2195 = vmatprep.subr.mxu0 0.0
    %2196 = vmatpush1.msra.mxu0 0.0
    %2197 = vmatprep.subr.mxu0 0.0
    %2198 = vmatpush1.msra.mxu0 0.0
    %2199 = vmatprep.subr.mxu0 0.0
    %2200 = vmatpush1.msra.mxu0 0.0
    %2201 = vmatprep.subr.mxu0 0.0
    %2202 = vmatpush1.msra.mxu0 0.0
    %2203 = vmatprep.subr.mxu0 0.0
    %2204 = vmatpush1.msra.mxu0 0.0
    %2205 = vmatprep.subr.mxu0 0.0
    %2206 = vmatpush1.msra.mxu0 0.0
    %2207 = vmatprep.subr.mxu0 0.0
    %2208 = vmatpush1.msra.mxu0 0.0
    %2209 = vmatprep.subr.mxu0 0.0
    %2210 = vmatpush1.msra.mxu0 0.0
    %2211 = vmatprep.subr.mxu0 0.0
    %2212 = vmatpush1.msra.mxu0 0.0
    %2213 = vmatprep.subr.mxu0 0.0
    %2214 = vmatpush1.msra.mxu0 0.0
    %2215 = vmatprep.subr.mxu0 0.0
    %2216 = vmatpush1.msra.mxu0 0.0
    %2217 = vmatprep.subr.mxu0 0.0
    %2218 = vmatpush1.msra.mxu0 0.0
    %2219 = vmatprep.subr.mxu0 0.0
    %2220 = vmatpush1.msra.mxu0 0.0
    %2221 = vmatprep.subr.mxu0 0.0
    %2222 = vmatpush1.msra.mxu0 0.0
    %2223 = vmatprep.subr.mxu0 0.0
    %2224 = vmatpush1.msra.mxu0 0.0
    %2225 = vmatprep.subr.mxu0 0.0
    %2226 = vmatpush1.msra.mxu0 0.0
    %2227 = vmatprep.subr.mxu0 0.0
    %2228 = vmatpush1.msra.mxu0 0.0
    %2229 = vmatprep.subr.mxu0 0.0
    %2230 = vmatpush1.msra.mxu0 0.0
    %2231 = vmatprep.subr.mxu0 0.0
    %2232 = vmatpush1.msra.mxu0 0.0
    %2233 = vmatprep.subr.mxu0 0.0
    %2234 = vmatpush1.msra.mxu0 0.0
    %2235 = vmatprep.subr.mxu0 0.0
    %2236 = vmatpush1.msra.mxu0 0.0
    %2237 = vmatprep.subr.mxu0 0.0
    %2238 = vmatpush1.msra.mxu0 0.0
    %2239 = vmatprep.subr.mxu0 0.0
    %2240 = vmatpush1.msra.mxu0 0.0
    %2241 = vmatprep.subr.mxu0 0.0
    %2242 = vmatpush1.msra.mxu0 0.0
    %2243 = vmatprep.subr.mxu0 0.0
    %2244 = vmatpush1.msra.mxu0 0.0
    %2245 = vmatprep.mubr.f32.mxu0 0.0
    %2246 = vmatmul.mubr.f32.gmra.mrb[0].mxu0 %v2176
    %v2247 = vpop.f32.mrb[0].mxu0
    %v2248 = vadd.f32 %v2173, %v2247
    %v2249 = vpop.f32.mrb[0].mxu0
    %2250 = vmatprep.mubr.f32.mxu0 0.0
    %2251 = vmatmul.mubr.f32.gmra.mrb[0].mxu0 %v2179
    %v2252 = vpop.f32.mrb[0].mxu0
    %v2253 = vadd.f32 %v2173, %v2252
    %v2254 = vpop.f32.mrb[0].mxu0
    %2255 = vdwg.mxu0
    %v2256 = vmax.f32 %v2248, 0.0
    %v2257 = vmax.f32 %v2253, 0.0
    %v2258 = vld [vmem:[%s9] sm:$0xff]
    %v2259 = vld [vmem:[%s9 + $0x8] sm:$0xff]
    %v2260 = vld [vmem:[%s9 + $0x10] sm:$0xff]
    %v2261 = vld [vmem:[%s9 + $0x18] sm:$0xff]
    %v2262 = vld [vmem:[%s9 + $0x20] sm:$0xff]
    %v2263 = vld [vmem:[%s9 + $0x28] sm:$0xff]
    %v2264 = vld [vmem:[%s9 + $0x30] sm:$0xff]
    %v2265 = vld [vmem:[%s9 + $0x38] sm:$0xff]
    %v2266 = vld [vmem:[%s10] sm:$0x1]
    %v2268 = vlaneseq
    %v2269 = vshrl.u32 %v2268, 7
    %v2270 = vsub.s32 0, %v2269
    %v2271 = vrot.slane %v2266, %v2270
    %vm2273 = vcmask 523264
    %v2275 = vsel %vm2273, %v2256, 0
    %v2278 = vsel %vm2273, %v2257, 0
    %2280 = vmatprep.subr.mxu0 0.0
    %2281 = vmatpush1.msra.mxu0 %v2258
    %2282 = vmatprep.subr.mxu0 0.0
    %2283 = vmatpush1.msra.mxu0 %v2259
    %2284 = vmatprep.subr.mxu0 0.0
    %2285 = vmatpush1.msra.mxu0 %v2260
    %2286 = vmatprep.subr.mxu0 0.0
    %2287 = vmatpush1.msra.mxu0 %v2261
    %2288 = vmatprep.subr.mxu0 0.0
    %2289 = vmatpush1.msra.mxu0 %v2262
    %2290 = vmatprep.subr.mxu0 0.0
    %2291 = vmatpush1.msra.mxu0 %v2263
    %2292 = vmatprep.subr.mxu0 0.0
    %2293 = vmatpush1.msra.mxu0 %v2264
    %2294 = vmatprep.subr.mxu0 0.0
    %2295 = vmatpush1.msra.mxu0 %v2265
    %2296 = vmatprep.subr.mxu0 0.0
    %2297 = vmatpush1.msra.mxu0 0.0
    %2298 = vmatprep.subr.mxu0 0.0
    %2299 = vmatpush1.msra.mxu0 0.0
    %2300 = vmatprep.subr.mxu0 0.0
    %2301 = vmatpush1.msra.mxu0 0.0
    %2302 = vmatprep.subr.mxu0 0.0
    %2303 = vmatpush1.msra.mxu0 0.0
    %2304 = vmatprep.subr.mxu0 0.0
    %2305 = vmatpush1.msra.mxu0 0.0
    %2306 = vmatprep.subr.mxu0 0.0
    %2307 = vmatpush1.msra.mxu0 0.0
    %2308 = vmatprep.subr.mxu0 0.0
    %2309 = vmatpush1.msra.mxu0 0.0
    %2310 = vmatprep.subr.mxu0 0.0
    %2311 = vmatpush1.msra.mxu0 0.0
    %2312 = vmatprep.subr.mxu0 0.0
    %2313 = vmatpush1.msra.mxu0 0.0
    %2314 = vmatprep.subr.mxu0 0.0
    %2315 = vmatpush1.msra.mxu0 0.0
    %2316 = vmatprep.subr.mxu0 0.0
    %2317 = vmatpush1.msra.mxu0 0.0
    %2318 = vmatprep.subr.mxu0 0.0
    %2319 = vmatpush1.msra.mxu0 0.0
    %2320 = vmatprep.subr.mxu0 0.0
    %2321 = vmatpush1.msra.mxu0 0.0
    %2322 = vmatprep.subr.mxu0 0.0
    %2323 = vmatpush1.msra.mxu0 0.0
    %2324 = vmatprep.subr.mxu0 0.0
    %2325 = vmatpush1.msra.mxu0 0.0
    %2326 = vmatprep.subr.mxu0 0.0
    %2327 = vmatpush1.msra.mxu0 0.0
    %2328 = vmatprep.subr.mxu0 0.0
    %2329 = vmatpush1.msra.mxu0 0.0
    %2330 = vmatprep.subr.mxu0 0.0
    %2331 = vmatpush1.msra.mxu0 0.0
    %2332 = vmatprep.subr.mxu0 0.0
    %2333 = vmatpush1.msra.mxu0 0.0
    %2334 = vmatprep.subr.mxu0 0.0
    %2335 = vmatpush1.msra.mxu0 0.0
    %2336 = vmatprep.subr.mxu0 0.0
    %2337 = vmatpush1.msra.mxu0 0.0
    %2338 = vmatprep.subr.mxu0 0.0
    %2339 = vmatpush1.msra.mxu0 0.0
    %2340 = vmatprep.subr.mxu0 0.0
    %2341 = vmatpush1.msra.mxu0 0.0
    %2342 = vmatprep.subr.mxu0 0.0
    %2343 = vmatpush1.msra.mxu0 0.0
    %2344 = vmatprep.mubr.f32.mxu0 0.0
    %2345 = vmatmul.mubr.f32.gmra.mrb[0].mxu0 %v2275
    %v2346 = vpop.f32.mrb[0].mxu0
    %v2347 = vadd.f32 %v2271, %v2346
    %v2348 = vpop.f32.mrb[0].mxu0
    %2349 = vmatprep.mubr.f32.mxu0 0.0
    %2350 = vmatmul.mubr.f32.gmra.mrb[0].mxu0 %v2278
    %v2351 = vpop.f32.mrb[0].mxu0
    %v2352 = vadd.f32 %v2271, %v2351
    %v2353 = vpop.f32.mrb[0].mxu0
    %2354 = vdwg.mxu0
    %v2355 = vadd.f32 %v2347, %v2162
    %v2356 = vadd.f32 %v2352, %v2163
    %v2357 = vsel %vm107, %v2355, 0.0
    %2358 = vadd.xlane.f32.xlu0 %v2357
    %v2359 = vpop.xlane.xlu0 %2358
    %v2360 = vsel %vm107, %v2356, 0.0
    %2361 = vadd.xlane.f32.xlu0 %v2360
    %v2362 = vpop.xlane.xlu0 %2361
    %v2363 = vmul.f32 %v2359, %v2125
    %v2364 = vmul.f32 %v2362, %v2125
    %v2365 = vsub.f32 %v2355, %v2363
    %v2366 = vsub.f32 %v2356, %v2364
    %v2367 = vmul.f32 %v2365, %v2365
    %v2368 = vmul.f32 %v2366, %v2366
    %v2369 = vsel %vm107, %v2367, 0.0
    %2370 = vadd.xlane.f32.xlu0 %v2369
    %v2371 = vpop.xlane.xlu0 %2370
    %v2372 = vsel %vm107, %v2368, 0.0
    %2373 = vadd.xlane.f32.xlu0 %v2372
    %v2374 = vpop.xlane.xlu0 %2373
    %v2375 = vmul.f32 %v2371, %v2125
    %v2376 = vmul.f32 %v2374, %v2125
    %v2377 = vadd.f32 %v2375, 1e-06
    %v2378 = vadd.f32 %v2376, 1e-06
    %v2379 = vrsqrt.pop %v2377
    %v2380 = vrsqrt.pop %v2378
    %v2381 = vmul.f32 %v2365, %v2379
    %v2382 = vmul.f32 %v2366, %v2380
    %v2383 = vld [vmem:[%s11] sm:$0x1]
    %v2385 = vlaneseq
    %v2386 = vshrl.u32 %v2385, 7
    %v2387 = vsub.s32 0, %v2386
    %v2388 = vrot.slane %v2383, %v2387
    %v2390 = vmul.f32 %v2381, %v2388
    %v2391 = vmul.f32 %v2382, %v2388
    %v2392 = vld [vmem:[%s12] sm:$0x1]
    %v2394 = vlaneseq
    %v2395 = vshrl.u32 %v2394, 7
    %v2396 = vsub.s32 0, %v2395
    %v2397 = vrot.slane %v2392, %v2396
    %v2399 = vadd.f32 %v2390, %v2397
    %v2400 = vadd.f32 %v2391, %v2397
    %2401 = vst.msk [vmem:[#allocation10] sm:$0xff] %vm107, %v2399
    %2402 = vst.msk [vmem:[#allocation10 + $0x8] sm:$0xff] %vm107, %v2400
    // Predicated region
    $region70: #{tpu_custom_call.1} parent=1 // pred_check
      _
    $region71: #{tpu_custom_call.1} parent=1 // pred_check_branch
      %2404 = sbr.rel (0) target = $region73
    $region72: #{tpu_custom_call.1} parent=1 // pred_region
      %s2406 = ssub.s32 256, 256
      %2407 = vsyncadd [#allocation4], %s2406
      %s2408 = sshll.u32 [#allocation10], 4
      %s2409 = int_to_ptr.vmem [resolvable:$true] %s2408
      %2414 = dma.vmem_to_hbm [thread:$0]  %s2409, 256, %s13, [#allocation4], 128, 128, 8
    $region73: #{tpu_custom_call.1} parent=1 // pred_fallthru
      _
    // Predicated region
    $region74: #{tpu_custom_call.1} parent=1 // pred_check
      _
    $region75: #{tpu_custom_call.1} parent=1 // pred_check_branch
      %2416 = sbr.rel (0) target = $region77
    $region76: #{tpu_custom_call.1} parent=1 // pred_region
      %2417 = dma.done [#allocation4], 256
    $region77: #{tpu_custom_call.1} parent=1 // pred_fallthru
      _
    %2418 = vsyncpa [#allocation3], 1
    %2419 = vsyncpa [#allocation6], 1
    %2420 = vsyncpa [#allocation9], 1
    %2421 = vsyncpa [#allocation4], 1

</llo_original>
